<compile_context>
chip_gen: v5e
topology: v5e:2x2
jax: 0.10.0
libtpu: 0.0.40
codegen_flags: <defaults>
</compile_context>

<pallas_src>
import functools

import jax
import jax.numpy as jnp
from jax import lax
from jax.experimental import pallas as pl
from jax.experimental.pallas import tpu as pltpu
import numpy as np


# ----------------------------------------------------------------------------
# Fused Pallas kernel body
# ----------------------------------------------------------------------------
def _fused_attn_kernel(cols_ref, patches_ref, wv_ref, bv_ref, wpe_ref, bpe_ref,
                       wqk_ref, wproj_ref, bproj_ref, selmask_ref, o_ref,
                       *, num_heads, dim, pp, n_patches):
    f32 = jnp.float32
    bf16 = jnp.bfloat16
    N = n_patches

    # 3x3 conv as a dense per-pixel matmul: rows = (patch offset, patch index),
    # M = pp*N = 256 fills the MXU row dimension.
    v_pix = (jnp.dot(cols_ref[0], wv_ref[...], preferred_element_type=f32)
             + bv_ref[...])                                          # (pp*N, dim)

    # Per-patch value slab v2[k, off*dim + c] = v_pix[off*N + k, c]; built with
    # static tile-aligned row slices + one lane concat so the key/patch axis is
    # isolated as the contraction dim of the attn@v matmul.
    v2 = jnp.concatenate(
        [v_pix[off * N:(off + 1) * N, :] for off in range(pp)], axis=1)

    # Patch embedding and qk projection (1/sqrt(hd) pre-folded into the q half).
    emb = (jnp.dot(patches_ref[0], wpe_ref[...], preferred_element_type=f32)
           + bpe_ref[...])                                           # (N, dim)
    qk = jnp.dot(emb.astype(bf16), wqk_ref[...], preferred_element_type=f32)
    q, k = qk[:, :dim], qk[:, dim:]

    sel = selmask_ref[...]                      # (nh, pp*dim) 0/1 head mask

    # All-head scores in ONE matmul: replicate q per head with the other heads'
    # channels zeroed (rows ordered head-major: row = h*N + n).
    q_bd = jnp.concatenate(
        [q * sel[h:h + 1, :dim] for h in range(num_heads)], axis=0)  # (nh*N, dim)
    s = lax.dot_general(q_bd.astype(bf16), k.astype(bf16),
                        (((1,), (1,)), ((), ())),
                        preferred_element_type=f32)                  # (nh*N, N)

    # Row-wise softmax: every row is exactly one (head, query-patch) group.
    m = jnp.max(s, axis=-1, keepdims=True)
    e = jnp.exp(s - m)
    denom = jnp.sum(e, axis=-1, keepdims=True)
    attn = e * pl.reciprocal(denom, approx=True)    # EUP slot, not a VPU divide

    # attn @ v for every head/offset/channel in ONE matmul (M=128, N=512).
    av = jnp.dot(attn.astype(bf16), v2.astype(bf16),
                 preferred_element_type=f32)                         # (nh*N, pp*dim)

    # Head selection: channel c belongs to head c // head_dim; keep that head's
    # row block per channel.  Pure VPU mask-and-add on full-width tiles.
    slab = av[:N, :] * sel[0:1, :]
    for h in range(1, num_heads):
        slab = slab + av[h * N:(h + 1) * N, :] * sel[h:h + 1, :]     # (N, pp*dim)

    # Back to per-pixel rows (sublane concat) for the dense 1x1 projection.
    out_pix = jnp.concatenate(
        [slab[:, off * dim:(off + 1) * dim] for off in range(pp)], axis=0)
    y = (jnp.dot(out_pix.astype(bf16), wproj_ref[...],
                 preferred_element_type=f32) + bproj_ref[...])        # (pp*N, dim)
    o_ref[0] = y.astype(o_ref.dtype)


# ----------------------------------------------------------------------------
# Pure-JAX index-shuffle glue (no FLOPs)
# ----------------------------------------------------------------------------
def _im2col_3x3(x):
    """(B, Cin, H, W) -> (B, H, W, Cin*9), feature = c*9 + di*3 + dj (pad=1)."""
    B, Cin, H, W = x.shape
    xp = jnp.pad(x, ((0, 0), (0, 0), (1, 1), (1, 1)))
    cols = [xp[:, :, di:di + H, dj:dj + W] for di in range(3) for dj in range(3)]
    cols = jnp.stack(cols, axis=2)             # (B, Cin, 9, H, W)
    cols = cols.transpose(0, 3, 4, 1, 2)       # (B, H, W, Cin, 9)
    return cols.reshape(B, H, W, Cin * 9)


def im2col_offset_major(x, p):
    """(B,Cin,H,W) -> (B, p*p*N, Cin*9); row = (pi*p+pj)*N + (gi*Gw+gj)."""
    B, Cin, H, W = x.shape
    Gh, Gw = H // p, W // p
    K9 = Cin * 9
    c = _im2col_3x3(x).reshape(B, Gh, p, Gw, p, K9)
    c = c.transpose(0, 2, 4, 1, 3, 5)          # (B, pi, pj, gi, gj, K9)
    return c.reshape(B, p * p * Gh * Gw, K9)


def extract_patches(x, p):
    """(B, C, H, W) -> (B, N, C*p*p); n = gi*Gw+gj, feature = c*p*p + pi*p + pj."""
    B, C, H, W = x.shape
    Gh, Gw = H // p, W // p
    x = x.reshape(B, C, Gh, p, Gw, p).transpose(0, 2, 4, 1, 3, 5)
    return x.reshape(B, Gh * Gw, C * p * p)


# ----------------------------------------------------------------------------
# Attention.forward
# ----------------------------------------------------------------------------
def attention_forward(x, params, *, patch_size, num_heads):
    B, Cin, H, W = x.shape
    dim = params["w_pe"].shape[0]
    p = patch_size
    pp = p * p
    hd = dim // num_heads
    Gh, Gw = H // p, W // p
    N = Gh * Gw
    NPP = N * pp
    K9 = Cin * 9
    K9P = ((K9 + 31) // 32) * 32
    scale = hd ** (-0.5)
    cdt = jnp.bfloat16            # MXU operand dtype (f32 accumulation)

    # ---- one-time parameter prep (host-side, amortized) ----
    w_v = params["w_v"].reshape(dim, K9).T                       # (K9, dim)
    w_v = jnp.pad(w_v, ((0, K9P - K9), (0, 0))).astype(cdt)
    b_v = params["b_v"].reshape(1, dim).astype(jnp.float32)
    w_pe = params["w_pe"].reshape(dim, Cin * pp).T.astype(cdt)   # (Cin*pp, dim)
    b_pe = params["b_pe"].reshape(1, dim).astype(jnp.float32)
    w_qk = params["w_qk"]
    w_qk = jnp.concatenate([w_qk[:dim] * scale, w_qk[dim:]], axis=0).T.astype(cdt)
    w_pr = params["w_proj"].reshape(dim, dim).T.astype(cdt)      # y = a @ w_pr
    b_pr = params["b_proj"].reshape(1, dim).astype(jnp.float32)
    head_of_c = jnp.arange(dim) // hd
    qmask = (head_of_c[None, :] == jnp.arange(num_heads)[:, None]).astype(jnp.float32)
    selmask = jnp.tile(qmask, (1, pp))                           # (nh, pp*dim)

    # ---- index-shuffle glue ----
    cols = im2col_offset_major(x, p)                             # (B, pp*N, K9)
    cols = jnp.pad(cols, ((0, 0), (0, 0), (0, K9P - K9))).astype(cdt)
    patches = extract_patches(x, p).astype(cdt)                  # (B, N, Cin*pp)

    flops = 2 * B * (NPP * K9P * dim                 # 3x3 conv
                     + N * (Cin * pp) * dim          # patch embed
                     + N * dim * 2 * dim             # qk
                     + (num_heads * N) * dim * N     # scores
                     + (num_heads * N) * N * (pp * dim)  # attn @ v
                     + NPP * dim * dim)              # 1x1 proj
    bytes_accessed = (B * NPP * K9P * 2 + B * N * Cin * pp * 2
                      + (K9P * dim + Cin * pp * dim + dim * 2 * dim + dim * dim) * 2
                      + (3 * dim + num_heads * pp * dim) * 4
                      + B * NPP * dim * 4)
    cost = pl.CostEstimate(flops=flops,
                           transcendentals=B * num_heads * N * N,
                           bytes_accessed=bytes_accessed)

    kern = functools.partial(_fused_attn_kernel, num_heads=num_heads,
                             dim=dim, pp=pp, n_patches=N)
    y_slab = pl.pallas_call(
        kern,
        out_shape=jax.ShapeDtypeStruct((B, NPP, dim), x.dtype),
        grid=(B,),
        in_specs=[
            pl.BlockSpec((1, NPP, K9P), lambda b: (b, 0, 0)),        # cols (bf16)
            pl.BlockSpec((1, N, Cin * pp), lambda b: (b, 0, 0)),     # patches (bf16)
            pl.BlockSpec((K9P, dim), lambda b: (0, 0)),              # w_v
            pl.BlockSpec((1, dim), lambda b: (0, 0)),                # b_v
            pl.BlockSpec((Cin * pp, dim), lambda b: (0, 0)),         # w_pe
            pl.BlockSpec((1, dim), lambda b: (0, 0)),                # b_pe
            pl.BlockSpec((dim, 2 * dim), lambda b: (0, 0)),          # w_qk (scaled)
            pl.BlockSpec((dim, dim), lambda b: (0, 0)),              # w_proj^T
            pl.BlockSpec((1, dim), lambda b: (0, 0)),                # b_proj
            pl.BlockSpec((num_heads, pp * dim), lambda b: (0, 0)),   # head mask
        ],
        out_specs=pl.BlockSpec((1, NPP, dim), lambda b: (b, 0, 0)),
        compiler_params=pltpu.CompilerParams(
            dimension_semantics=("parallel",),
            vmem_limit_bytes=64 * 1024 * 1024),
        cost_estimate=cost,
    )(cols, patches, w_v, b_v, w_pe, b_pe, w_qk, w_pr, b_pr, selmask)

    # fold: row = (pi*p+pj)*N + gi*Gw+gj  ->  (B, dim, H, W)   (pure permute)
    y = y_slab.reshape(B, p, p, Gh, Gw, dim).transpose(0, 5, 3, 1, 4, 2)
    return y.reshape(B, dim, H, W)


# ----------------------------------------------------------------------------
# Pure-JAX reference (mirrors the PyTorch ops) for validation
# ----------------------------------------------------------------------------
def reference(x, params, *, patch_size, num_heads):
    p = patch_size
    dn = ("NCHW", "OIHW", "NCHW")
    v = lax.conv_general_dilated(
        x, params["w_v"], (1, 1), ((1, 1), (1, 1)), dimension_numbers=dn
    ) + params["b_v"][None, :, None, None]
    B, C, H, W = v.shape
    pe = lax.conv_general_dilated(
        x, params["w_pe"], (p, p), "VALID", dimension_numbers=dn
    ) + params["b_pe"][None, :, None, None]
    emb = pe.reshape(B, C, -1).transpose(0, 2, 1)             # (B, N, dim)
    N = emb.shape[1]
    Gh, Gw = H // p, W // p
    # F.unfold(v, p, stride=p)
    vu = v.reshape(B, C, Gh, p, Gw, p).transpose(0, 1, 3, 5, 2, 4)
    vu = vu.reshape(B, C * p * p, N)
    vh = vu.reshape(B, num_heads, p * p * C // num_heads, N).transpose(0, 1, 3, 2)
    hd = C // num_heads
    scale = hd ** (-0.5)
    qk = emb @ params["w_qk"].T
    qk = qk.reshape(B, N, 2, num_heads, hd).transpose(2, 0, 3, 1, 4)
    q, k = qk[0], qk[1]
    attn = jax.nn.softmax((q @ jnp.swapaxes(k, -2, -1)) * scale, axis=-1)
    out = (attn @ vh).transpose(0, 1, 3, 2).reshape(B, C * p * p, N)
    # F.fold(out, (H, W), kernel=p, stride=p)
    folded = out.reshape(B, C, p, p, Gh, Gw).transpose(0, 1, 4, 2, 5, 3)
    folded = folded.reshape(B, C, H, W)
    y = lax.conv_general_dilated(
        folded, params["w_proj"], (1, 1), "VALID", dimension_numbers=dn
    ) + params["b_proj"][None, :, None, None]
    return y


# ----------------------------------------------------------------------------
# main
# ----------------------------------------------------------------------------
if __name__ == "__main__":
    B, in_chans, H, W = 2, 3, 16, 16
    patch_size, dim, num_heads = 4, 32, 8

    key = jax.random.PRNGKey(0)
    ks = jax.random.split(key, 8)
    params = {
        "w_pe": 0.05 * jax.random.normal(ks[0], (dim, in_chans, patch_size, patch_size), jnp.float32),
        "b_pe": 0.05 * jax.random.normal(ks[1], (dim,), jnp.float32),
        "w_qk": 0.05 * jax.random.normal(ks[2], (2 * dim, dim), jnp.float32),
        "w_v": 0.05 * jax.random.normal(ks[3], (dim, in_chans, 3, 3), jnp.float32),
        "b_v": 0.05 * jax.random.normal(ks[4], (dim,), jnp.float32),
        "w_proj": 0.05 * jax.random.normal(ks[5], (dim, dim, 1, 1), jnp.float32),
        "b_proj": 0.05 * jax.random.normal(ks[6], (dim,), jnp.float32),
    }
    x = jax.random.normal(ks[7], (B, in_chans, H, W), jnp.float32)

    y = attention_forward(x, params, patch_size=patch_size, num_heads=num_heads)
    y = jax.block_until_ready(y)

    with jax.default_matmul_precision("highest"):
        y_ref = jax.block_until_ready(
            reference(x, params, patch_size=patch_size, num_heads=num_heads)
        )

    assert y.shape == (B, dim, H, W), y.shape
    assert np.isfinite(np.asarray(y)).all()
    # Tolerance covers bf16 MXU operands (f32 accumulation) and the approximate
    # EUP reciprocal in the softmax epilogue; layout bugs would be O(0.1) off.
    np.testing.assert_allclose(np.asarray(y), np.asarray(y_ref), atol=1e-2, rtol=1e-2)
    print("KERNEL_OK")
</pallas_src>

<mosaic_0001>
module attributes {stable_mosaic.version = 11 : i64} {
  func.func @_fused_attn_kernel(%arg0: i32, %arg1: memref<1x256x32xbf16, #tpu.memory_space<vmem>>, %arg2: memref<1x16x48xbf16, #tpu.memory_space<vmem>>, %arg3: memref<32x32xbf16, #tpu.memory_space<vmem>>, %arg4: memref<1x32xf32, #tpu.memory_space<vmem>>, %arg5: memref<48x32xbf16, #tpu.memory_space<vmem>>, %arg6: memref<1x32xf32, #tpu.memory_space<vmem>>, %arg7: memref<32x64xbf16, #tpu.memory_space<vmem>>, %arg8: memref<32x32xbf16, #tpu.memory_space<vmem>>, %arg9: memref<1x32xf32, #tpu.memory_space<vmem>>, %arg10: memref<8x512xf32, #tpu.memory_space<vmem>>, %arg11: memref<1x256x32xf32, #tpu.memory_space<vmem>>) attributes {dimension_semantics = [#tpu.dimension_semantics<parallel>], iteration_bounds = array<i64: 2>, scalar_prefetch = 0 : i64, scratch_operands = 0 : i64, tpu.core_type = #tpu.core_type<tc>, window_params = [{transform_indices = @transform_0, window_bounds = array<i64: 1, 256, 32>}, {transform_indices = @transform_1, window_bounds = array<i64: 1, 16, 48>}, {pipeline_mode = #tpu.pipeline_mode<synchronous>, transform_indices = @transform_2, window_bounds = array<i64: 32, 32>}, {pipeline_mode = #tpu.pipeline_mode<synchronous>, transform_indices = @transform_3, window_bounds = array<i64: 1, 32>}, {pipeline_mode = #tpu.pipeline_mode<synchronous>, transform_indices = @transform_4, window_bounds = array<i64: 48, 32>}, {pipeline_mode = #tpu.pipeline_mode<synchronous>, transform_indices = @transform_5, window_bounds = array<i64: 1, 32>}, {pipeline_mode = #tpu.pipeline_mode<synchronous>, transform_indices = @transform_6, window_bounds = array<i64: 32, 64>}, {pipeline_mode = #tpu.pipeline_mode<synchronous>, transform_indices = @transform_7, window_bounds = array<i64: 32, 32>}, {pipeline_mode = #tpu.pipeline_mode<synchronous>, transform_indices = @transform_8, window_bounds = array<i64: 1, 32>}, {pipeline_mode = #tpu.pipeline_mode<synchronous>, transform_indices = @transform_9, window_bounds = array<i64: 8, 512>}, {transform_indices = @transform_10, window_bounds = array<i64: 1, 256, 32>}]} {
    %c0 = arith.constant 0 : index
    %c0_0 = arith.constant 0 : index
    %c0_1 = arith.constant 0 : index
    %0 = vector.load %arg1[%c0, %c0_0, %c0_1] : memref<1x256x32xbf16, #tpu.memory_space<vmem>>, vector<1x256x32xbf16>
    %1 = vector.shape_cast %0 : vector<1x256x32xbf16> to vector<256x32xbf16>
    %c0_2 = arith.constant 0 : index
    %c0_3 = arith.constant 0 : index
    %2 = vector.load %arg3[%c0_2, %c0_3] : memref<32x32xbf16, #tpu.memory_space<vmem>>, vector<32x32xbf16>
    %cst = arith.constant dense<0.000000e+00> : vector<256x32xf32>
    %3 = tpu.matmul %1, %2, %cst {dimension_numbers = #tpu.dot_dimension_numbers<[1], [0], [0], [1], [0, 0, 1, 1], [], []>} : vector<256x32xbf16>, vector<32x32xbf16>, vector<256x32xf32> -> vector<256x32xf32>
    %c0_4 = arith.constant 0 : index
    %c0_5 = arith.constant 0 : index
    %4 = vector.load %arg4[%c0_4, %c0_5] : memref<1x32xf32, #tpu.memory_space<vmem>>, vector<1x32xf32>
    %5 = vector.broadcast %4 : vector<1x32xf32> to vector<256x32xf32>
    %6 = arith.addf %3, %5 : vector<256x32xf32>
    %7 = vector.extract_strided_slice %6 {offsets = [0, 0], sizes = [16, 32], strides = [1, 1]} : vector<256x32xf32> to vector<16x32xf32>
    %8 = vector.extract_strided_slice %6 {offsets = [16, 0], sizes = [16, 32], strides = [1, 1]} : vector<256x32xf32> to vector<16x32xf32>
    %9 = vector.extract_strided_slice %6 {offsets = [32, 0], sizes = [16, 32], strides = [1, 1]} : vector<256x32xf32> to vector<16x32xf32>
    %10 = vector.extract_strided_slice %6 {offsets = [48, 0], sizes = [16, 32], strides = [1, 1]} : vector<256x32xf32> to vector<16x32xf32>
    %11 = vector.extract_strided_slice %6 {offsets = [64, 0], sizes = [16, 32], strides = [1, 1]} : vector<256x32xf32> to vector<16x32xf32>
    %12 = vector.extract_strided_slice %6 {offsets = [80, 0], sizes = [16, 32], strides = [1, 1]} : vector<256x32xf32> to vector<16x32xf32>
    %13 = vector.extract_strided_slice %6 {offsets = [96, 0], sizes = [16, 32], strides = [1, 1]} : vector<256x32xf32> to vector<16x32xf32>
    %14 = vector.extract_strided_slice %6 {offsets = [112, 0], sizes = [16, 32], strides = [1, 1]} : vector<256x32xf32> to vector<16x32xf32>
    %15 = vector.extract_strided_slice %6 {offsets = [128, 0], sizes = [16, 32], strides = [1, 1]} : vector<256x32xf32> to vector<16x32xf32>
    %16 = vector.extract_strided_slice %6 {offsets = [144, 0], sizes = [16, 32], strides = [1, 1]} : vector<256x32xf32> to vector<16x32xf32>
    %17 = vector.extract_strided_slice %6 {offsets = [160, 0], sizes = [16, 32], strides = [1, 1]} : vector<256x32xf32> to vector<16x32xf32>
    %18 = vector.extract_strided_slice %6 {offsets = [176, 0], sizes = [16, 32], strides = [1, 1]} : vector<256x32xf32> to vector<16x32xf32>
    %19 = vector.extract_strided_slice %6 {offsets = [192, 0], sizes = [16, 32], strides = [1, 1]} : vector<256x32xf32> to vector<16x32xf32>
    %20 = vector.extract_strided_slice %6 {offsets = [208, 0], sizes = [16, 32], strides = [1, 1]} : vector<256x32xf32> to vector<16x32xf32>
    %21 = vector.extract_strided_slice %6 {offsets = [224, 0], sizes = [16, 32], strides = [1, 1]} : vector<256x32xf32> to vector<16x32xf32>
    %22 = vector.extract_strided_slice %6 {offsets = [240, 0], sizes = [16, 32], strides = [1, 1]} : vector<256x32xf32> to vector<16x32xf32>
    %23 = tpu.concatenate %7, %8, %9, %10, %11, %12, %13, %14, %15, %16, %17, %18, %19, %20, %21, %22 in 1 : vector<16x32xf32>, vector<16x32xf32>, vector<16x32xf32>, vector<16x32xf32>, vector<16x32xf32>, vector<16x32xf32>, vector<16x32xf32>, vector<16x32xf32>, vector<16x32xf32>, vector<16x32xf32>, vector<16x32xf32>, vector<16x32xf32>, vector<16x32xf32>, vector<16x32xf32>, vector<16x32xf32>, vector<16x32xf32> -> vector<16x512xf32>
    %c0_6 = arith.constant 0 : index
    %c0_7 = arith.constant 0 : index
    %c0_8 = arith.constant 0 : index
    %24 = vector.load %arg2[%c0_6, %c0_7, %c0_8] : memref<1x16x48xbf16, #tpu.memory_space<vmem>>, vector<1x16x48xbf16>
    %25 = vector.shape_cast %24 : vector<1x16x48xbf16> to vector<16x48xbf16>
    %c0_9 = arith.constant 0 : index
    %c0_10 = arith.constant 0 : index
    %26 = vector.load %arg5[%c0_9, %c0_10] : memref<48x32xbf16, #tpu.memory_space<vmem>>, vector<48x32xbf16>
    %cst_11 = arith.constant dense<0.000000e+00> : vector<16x32xf32>
    %27 = tpu.matmul %25, %26, %cst_11 {dimension_numbers = #tpu.dot_dimension_numbers<[1], [0], [0], [1], [0, 0, 1, 1], [], []>} : vector<16x48xbf16>, vector<48x32xbf16>, vector<16x32xf32> -> vector<16x32xf32>
    %c0_12 = arith.constant 0 : index
    %c0_13 = arith.constant 0 : index
    %28 = vector.load %arg6[%c0_12, %c0_13] : memref<1x32xf32, #tpu.memory_space<vmem>>, vector<1x32xf32>
    %29 = vector.broadcast %28 : vector<1x32xf32> to vector<16x32xf32>
    %30 = arith.addf %27, %29 : vector<16x32xf32>
    %31 = arith.truncf %30 : vector<16x32xf32> to vector<16x32xbf16>
    %c0_14 = arith.constant 0 : index
    %c0_15 = arith.constant 0 : index
    %32 = vector.load %arg7[%c0_14, %c0_15] : memref<32x64xbf16, #tpu.memory_space<vmem>>, vector<32x64xbf16>
    %cst_16 = arith.constant dense<0.000000e+00> : vector<16x64xf32>
    %33 = tpu.matmul %31, %32, %cst_16 {dimension_numbers = #tpu.dot_dimension_numbers<[1], [0], [0], [1], [0, 0, 1, 1], [], []>} : vector<16x32xbf16>, vector<32x64xbf16>, vector<16x64xf32> -> vector<16x64xf32>
    %34 = vector.extract_strided_slice %33 {offsets = [0, 0], sizes = [16, 32], strides = [1, 1]} : vector<16x64xf32> to vector<16x32xf32>
    %35 = vector.extract_strided_slice %33 {offsets = [0, 32], sizes = [16, 32], strides = [1, 1]} : vector<16x64xf32> to vector<16x32xf32>
    %c0_17 = arith.constant 0 : index
    %c0_18 = arith.constant 0 : index
    %36 = vector.load %arg10[%c0_17, %c0_18] : memref<8x512xf32, #tpu.memory_space<vmem>>, vector<8x512xf32>
    %37 = vector.extract_strided_slice %36 {offsets = [0, 0], sizes = [1, 32], strides = [1, 1]} : vector<8x512xf32> to vector<1x32xf32>
    %38 = vector.broadcast %37 : vector<1x32xf32> to vector<16x32xf32>
    %39 = arith.mulf %34, %38 : vector<16x32xf32>
    %40 = vector.extract_strided_slice %36 {offsets = [1, 0], sizes = [1, 32], strides = [1, 1]} : vector<8x512xf32> to vector<1x32xf32>
    %41 = vector.broadcast %40 : vector<1x32xf32> to vector<16x32xf32>
    %42 = arith.mulf %34, %41 : vector<16x32xf32>
    %43 = vector.extract_strided_slice %36 {offsets = [2, 0], sizes = [1, 32], strides = [1, 1]} : vector<8x512xf32> to vector<1x32xf32>
    %44 = vector.broadcast %43 : vector<1x32xf32> to vector<16x32xf32>
    %45 = arith.mulf %34, %44 : vector<16x32xf32>
    %46 = vector.extract_strided_slice %36 {offsets = [3, 0], sizes = [1, 32], strides = [1, 1]} : vector<8x512xf32> to vector<1x32xf32>
    %47 = vector.broadcast %46 : vector<1x32xf32> to vector<16x32xf32>
    %48 = arith.mulf %34, %47 : vector<16x32xf32>
    %49 = vector.extract_strided_slice %36 {offsets = [4, 0], sizes = [1, 32], strides = [1, 1]} : vector<8x512xf32> to vector<1x32xf32>
    %50 = vector.broadcast %49 : vector<1x32xf32> to vector<16x32xf32>
    %51 = arith.mulf %34, %50 : vector<16x32xf32>
    %52 = vector.extract_strided_slice %36 {offsets = [5, 0], sizes = [1, 32], strides = [1, 1]} : vector<8x512xf32> to vector<1x32xf32>
    %53 = vector.broadcast %52 : vector<1x32xf32> to vector<16x32xf32>
    %54 = arith.mulf %34, %53 : vector<16x32xf32>
    %55 = vector.extract_strided_slice %36 {offsets = [6, 0], sizes = [1, 32], strides = [1, 1]} : vector<8x512xf32> to vector<1x32xf32>
    %56 = vector.broadcast %55 : vector<1x32xf32> to vector<16x32xf32>
    %57 = arith.mulf %34, %56 : vector<16x32xf32>
    %58 = vector.extract_strided_slice %36 {offsets = [7, 0], sizes = [1, 32], strides = [1, 1]} : vector<8x512xf32> to vector<1x32xf32>
    %59 = vector.broadcast %58 : vector<1x32xf32> to vector<16x32xf32>
    %60 = arith.mulf %34, %59 : vector<16x32xf32>
    %61 = tpu.concatenate %39, %42, %45, %48, %51, %54, %57, %60 in 0 : vector<16x32xf32>, vector<16x32xf32>, vector<16x32xf32>, vector<16x32xf32>, vector<16x32xf32>, vector<16x32xf32>, vector<16x32xf32>, vector<16x32xf32> -> vector<128x32xf32>
    %62 = arith.truncf %61 : vector<128x32xf32> to vector<128x32xbf16>
    %63 = arith.truncf %35 : vector<16x32xf32> to vector<16x32xbf16>
    %cst_19 = arith.constant dense<0.000000e+00> : vector<128x16xf32>
    %64 = tpu.matmul %62, %63, %cst_19 {dimension_numbers = #tpu.dot_dimension_numbers<[1], [1], [0], [0], [0, 0, 1, 0], [], []>} : vector<128x32xbf16>, vector<16x32xbf16>, vector<128x16xf32> -> vector<128x16xf32>
    %cst_20 = arith.constant dense<0xFF800000> : vector<128xf32>
    %65 = vector.multi_reduction <maximumf>, %64, %cst_20 [1] : vector<128x16xf32> to vector<128xf32>
    %66 = vector.shape_cast %65 : vector<128xf32> to vector<128x1xf32>
    %67 = vector.broadcast %66 : vector<128x1xf32> to vector<128x16xf32>
    %68 = arith.subf %64, %67 : vector<128x16xf32>
    %69 = math.exp %68 : vector<128x16xf32>
    %cst_21 = arith.constant dense<0.000000e+00> : vector<128xf32>
    %70 = vector.multi_reduction <add>, %69, %cst_21 [1] : vector<128x16xf32> to vector<128xf32>
    %71 = vector.shape_cast %70 : vector<128xf32> to vector<128x1xf32>
    %72 = tpu.reciprocal %71 {approx = true} : vector<128x1xf32> -> vector<128x1xf32>
    %73 = vector.broadcast %72 : vector<128x1xf32> to vector<128x16xf32>
    %74 = arith.mulf %69, %73 : vector<128x16xf32>
    %75 = arith.truncf %74 : vector<128x16xf32> to vector<128x16xbf16>
    %76 = arith.truncf %23 : vector<16x512xf32> to vector<16x512xbf16>
    %cst_22 = arith.constant dense<0.000000e+00> : vector<128x512xf32>
    %77 = tpu.matmul %75, %76, %cst_22 {dimension_numbers = #tpu.dot_dimension_numbers<[1], [0], [0], [1], [0, 0, 1, 1], [], []>} : vector<128x16xbf16>, vector<16x512xbf16>, vector<128x512xf32> -> vector<128x512xf32>
    %78 = vector.extract_strided_slice %77 {offsets = [0, 0], sizes = [16, 512], strides = [1, 1]} : vector<128x512xf32> to vector<16x512xf32>
    %79 = vector.extract_strided_slice %36 {offsets = [0, 0], sizes = [1, 512], strides = [1, 1]} : vector<8x512xf32> to vector<1x512xf32>
    %80 = vector.broadcast %79 : vector<1x512xf32> to vector<16x512xf32>
    %81 = arith.mulf %78, %80 : vector<16x512xf32>
    %82 = vector.extract_strided_slice %77 {offsets = [16, 0], sizes = [16, 512], strides = [1, 1]} : vector<128x512xf32> to vector<16x512xf32>
    %83 = vector.extract_strided_slice %36 {offsets = [1, 0], sizes = [1, 512], strides = [1, 1]} : vector<8x512xf32> to vector<1x512xf32>
    %84 = vector.broadcast %83 : vector<1x512xf32> to vector<16x512xf32>
    %85 = arith.mulf %82, %84 : vector<16x512xf32>
    %86 = arith.addf %81, %85 : vector<16x512xf32>
    %87 = vector.extract_strided_slice %77 {offsets = [32, 0], sizes = [16, 512], strides = [1, 1]} : vector<128x512xf32> to vector<16x512xf32>
    %88 = vector.extract_strided_slice %36 {offsets = [2, 0], sizes = [1, 512], strides = [1, 1]} : vector<8x512xf32> to vector<1x512xf32>
    %89 = vector.broadcast %88 : vector<1x512xf32> to vector<16x512xf32>
    %90 = arith.mulf %87, %89 : vector<16x512xf32>
    %91 = arith.addf %86, %90 : vector<16x512xf32>
    %92 = vector.extract_strided_slice %77 {offsets = [48, 0], sizes = [16, 512], strides = [1, 1]} : vector<128x512xf32> to vector<16x512xf32>
    %93 = vector.extract_strided_slice %36 {offsets = [3, 0], sizes = [1, 512], strides = [1, 1]} : vector<8x512xf32> to vector<1x512xf32>
    %94 = vector.broadcast %93 : vector<1x512xf32> to vector<16x512xf32>
    %95 = arith.mulf %92, %94 : vector<16x512xf32>
    %96 = arith.addf %91, %95 : vector<16x512xf32>
    %97 = vector.extract_strided_slice %77 {offsets = [64, 0], sizes = [16, 512], strides = [1, 1]} : vector<128x512xf32> to vector<16x512xf32>
    %98 = vector.extract_strided_slice %36 {offsets = [4, 0], sizes = [1, 512], strides = [1, 1]} : vector<8x512xf32> to vector<1x512xf32>
    %99 = vector.broadcast %98 : vector<1x512xf32> to vector<16x512xf32>
    %100 = arith.mulf %97, %99 : vector<16x512xf32>
    %101 = arith.addf %96, %100 : vector<16x512xf32>
    %102 = vector.extract_strided_slice %77 {offsets = [80, 0], sizes = [16, 512], strides = [1, 1]} : vector<128x512xf32> to vector<16x512xf32>
    %103 = vector.extract_strided_slice %36 {offsets = [5, 0], sizes = [1, 512], strides = [1, 1]} : vector<8x512xf32> to vector<1x512xf32>
    %104 = vector.broadcast %103 : vector<1x512xf32> to vector<16x512xf32>
    %105 = arith.mulf %102, %104 : vector<16x512xf32>
    %106 = arith.addf %101, %105 : vector<16x512xf32>
    %107 = vector.extract_strided_slice %77 {offsets = [96, 0], sizes = [16, 512], strides = [1, 1]} : vector<128x512xf32> to vector<16x512xf32>
    %108 = vector.extract_strided_slice %36 {offsets = [6, 0], sizes = [1, 512], strides = [1, 1]} : vector<8x512xf32> to vector<1x512xf32>
    %109 = vector.broadcast %108 : vector<1x512xf32> to vector<16x512xf32>
    %110 = arith.mulf %107, %109 : vector<16x512xf32>
    %111 = arith.addf %106, %110 : vector<16x512xf32>
    %112 = vector.extract_strided_slice %77 {offsets = [112, 0], sizes = [16, 512], strides = [1, 1]} : vector<128x512xf32> to vector<16x512xf32>
    %113 = vector.extract_strided_slice %36 {offsets = [7, 0], sizes = [1, 512], strides = [1, 1]} : vector<8x512xf32> to vector<1x512xf32>
    %114 = vector.broadcast %113 : vector<1x512xf32> to vector<16x512xf32>
    %115 = arith.mulf %112, %114 : vector<16x512xf32>
    %116 = arith.addf %111, %115 : vector<16x512xf32>
    %117 = vector.extract_strided_slice %116 {offsets = [0, 0], sizes = [16, 32], strides = [1, 1]} : vector<16x512xf32> to vector<16x32xf32>
    %118 = vector.extract_strided_slice %116 {offsets = [0, 32], sizes = [16, 32], strides = [1, 1]} : vector<16x512xf32> to vector<16x32xf32>
    %119 = vector.extract_strided_slice %116 {offsets = [0, 64], sizes = [16, 32], strides = [1, 1]} : vector<16x512xf32> to vector<16x32xf32>
    %120 = vector.extract_strided_slice %116 {offsets = [0, 96], sizes = [16, 32], strides = [1, 1]} : vector<16x512xf32> to vector<16x32xf32>
    %121 = vector.extract_strided_slice %116 {offsets = [0, 128], sizes = [16, 32], strides = [1, 1]} : vector<16x512xf32> to vector<16x32xf32>
    %122 = vector.extract_strided_slice %116 {offsets = [0, 160], sizes = [16, 32], strides = [1, 1]} : vector<16x512xf32> to vector<16x32xf32>
    %123 = vector.extract_strided_slice %116 {offsets = [0, 192], sizes = [16, 32], strides = [1, 1]} : vector<16x512xf32> to vector<16x32xf32>
    %124 = vector.extract_strided_slice %116 {offsets = [0, 224], sizes = [16, 32], strides = [1, 1]} : vector<16x512xf32> to vector<16x32xf32>
    %125 = vector.extract_strided_slice %116 {offsets = [0, 256], sizes = [16, 32], strides = [1, 1]} : vector<16x512xf32> to vector<16x32xf32>
    %126 = vector.extract_strided_slice %116 {offsets = [0, 288], sizes = [16, 32], strides = [1, 1]} : vector<16x512xf32> to vector<16x32xf32>
    %127 = vector.extract_strided_slice %116 {offsets = [0, 320], sizes = [16, 32], strides = [1, 1]} : vector<16x512xf32> to vector<16x32xf32>
    %128 = vector.extract_strided_slice %116 {offsets = [0, 352], sizes = [16, 32], strides = [1, 1]} : vector<16x512xf32> to vector<16x32xf32>
    %129 = vector.extract_strided_slice %116 {offsets = [0, 384], sizes = [16, 32], strides = [1, 1]} : vector<16x512xf32> to vector<16x32xf32>
    %130 = vector.extract_strided_slice %116 {offsets = [0, 416], sizes = [16, 32], strides = [1, 1]} : vector<16x512xf32> to vector<16x32xf32>
    %131 = vector.extract_strided_slice %116 {offsets = [0, 448], sizes = [16, 32], strides = [1, 1]} : vector<16x512xf32> to vector<16x32xf32>
    %132 = vector.extract_strided_slice %116 {offsets = [0, 480], sizes = [16, 32], strides = [1, 1]} : vector<16x512xf32> to vector<16x32xf32>
    %133 = tpu.concatenate %117, %118, %119, %120, %121, %122, %123, %124, %125, %126, %127, %128, %129, %130, %131, %132 in 0 : vector<16x32xf32>, vector<16x32xf32>, vector<16x32xf32>, vector<16x32xf32>, vector<16x32xf32>, vector<16x32xf32>, vector<16x32xf32>, vector<16x32xf32>, vector<16x32xf32>, vector<16x32xf32>, vector<16x32xf32>, vector<16x32xf32>, vector<16x32xf32>, vector<16x32xf32>, vector<16x32xf32>, vector<16x32xf32> -> vector<256x32xf32>
    %134 = arith.truncf %133 : vector<256x32xf32> to vector<256x32xbf16>
    %c0_23 = arith.constant 0 : index
    %c0_24 = arith.constant 0 : index
    %135 = vector.load %arg8[%c0_23, %c0_24] : memref<32x32xbf16, #tpu.memory_space<vmem>>, vector<32x32xbf16>
    %cst_25 = arith.constant dense<0.000000e+00> : vector<256x32xf32>
    %136 = tpu.matmul %134, %135, %cst_25 {dimension_numbers = #tpu.dot_dimension_numbers<[1], [0], [0], [1], [0, 0, 1, 1], [], []>} : vector<256x32xbf16>, vector<32x32xbf16>, vector<256x32xf32> -> vector<256x32xf32>
    %c0_26 = arith.constant 0 : index
    %c0_27 = arith.constant 0 : index
    %137 = vector.load %arg9[%c0_26, %c0_27] : memref<1x32xf32, #tpu.memory_space<vmem>>, vector<1x32xf32>
    %138 = vector.broadcast %137 : vector<1x32xf32> to vector<256x32xf32>
    %139 = arith.addf %136, %138 : vector<256x32xf32>
    %c0_28 = arith.constant 0 : index
    %c0_29 = arith.constant 0 : index
    %c0_30 = arith.constant 0 : index
    %140 = vector.load %arg11[%c0_28, %c0_29, %c0_30] : memref<1x256x32xf32, #tpu.memory_space<vmem>>, vector<1x256x32xf32>
    %141 = vector.shape_cast %140 : vector<1x256x32xf32> to vector<256x32xf32>
    %142 = vector.shape_cast %139 : vector<256x32xf32> to vector<1x256x32xf32>
    tpu.vector_store %arg11[%c0_28, %c0_29, %c0_30], %142 {strides = array<i32>} : memref<1x256x32xf32, #tpu.memory_space<vmem>>, vector<1x256x32xf32>,
    return
  }
  func.func @transform_0(%arg0: i32) -> (i32, i32, i32) {
    %c0_i32 = arith.constant 0 : i32
    %c0_i32_0 = arith.constant 0 : i32
    %c0_i32_1 = arith.constant 0 : i32
    return %arg0, %c0_i32, %c0_i32_0 : i32, i32, i32
  }
  func.func @transform_1(%arg0: i32) -> (i32, i32, i32) {
    %c0_i32 = arith.constant 0 : i32
    %c0_i32_0 = arith.constant 0 : i32
    %c0_i32_1 = arith.constant 0 : i32
    return %arg0, %c0_i32, %c0_i32_0 : i32, i32, i32
  }
  func.func @transform_2(%arg0: i32) -> (i32, i32) {
    %c0_i32 = arith.constant 0 : i32
    %c0_i32_0 = arith.constant 0 : i32
    %c0_i32_1 = arith.constant 0 : i32
    return %c0_i32, %c0_i32_0 : i32, i32
  }
  func.func @transform_3(%arg0: i32) -> (i32, i32) {
    %c0_i32 = arith.constant 0 : i32
    %c0_i32_0 = arith.constant 0 : i32
    %c0_i32_1 = arith.constant 0 : i32
    return %c0_i32, %c0_i32_0 : i32, i32
  }
  func.func @transform_4(%arg0: i32) -> (i32, i32) {
    %c0_i32 = arith.constant 0 : i32
    %c0_i32_0 = arith.constant 0 : i32
    %c0_i32_1 = arith.constant 0 : i32
    return %c0_i32, %c0_i32_0 : i32, i32
  }
  func.func @transform_5(%arg0: i32) -> (i32, i32) {
    %c0_i32 = arith.constant 0 : i32
    %c0_i32_0 = arith.constant 0 : i32
    %c0_i32_1 = arith.constant 0 : i32
    return %c0_i32, %c0_i32_0 : i32, i32
  }
  func.func @transform_6(%arg0: i32) -> (i32, i32) {
    %c0_i32 = arith.constant 0 : i32
    %c0_i32_0 = arith.constant 0 : i32
    %c0_i32_1 = arith.constant 0 : i32
    return %c0_i32, %c0_i32_0 : i32, i32
  }
  func.func @transform_7(%arg0: i32) -> (i32, i32) {
    %c0_i32 = arith.constant 0 : i32
    %c0_i32_0 = arith.constant 0 : i32
    %c0_i32_1 = arith.constant 0 : i32
    return %c0_i32, %c0_i32_0 : i32, i32
  }
  func.func @transform_8(%arg0: i32) -> (i32, i32) {
    %c0_i32 = arith.constant 0 : i32
    %c0_i32_0 = arith.constant 0 : i32
    %c0_i32_1 = arith.constant 0 : i32
    return %c0_i32, %c0_i32_0 : i32, i32
  }
  func.func @transform_9(%arg0: i32) -> (i32, i32) {
    %c0_i32 = arith.constant 0 : i32
    %c0_i32_0 = arith.constant 0 : i32
    %c0_i32_1 = arith.constant 0 : i32
    return %c0_i32, %c0_i32_0 : i32, i32
  }
  func.func @transform_10(%arg0: i32) -> (i32, i32, i32) {
    %c0_i32 = arith.constant 0 : i32
    %c0_i32_0 = arith.constant 0 : i32
    %c0_i32_1 = arith.constant 0 : i32
    return %arg0, %c0_i32, %c0_i32_0 : i32, i32, i32
  }
}

</mosaic_0001>

<llo_original>
// kernel: tpu_custom_call.1
$region0: #{tpu_custom_call.1}
  #allocation0 [shape = 'u32[]', space=smem, size = 0x4, offset = 0x4, fixed_abs, tag = 'smem constant byte address 0x4 - core index']
  #allocation1 [shape = 'u32[72,128]{1,0:T(1,128)}', space=vmem, size = 0x9000, scoped, tag = 'internal scratch']
  %s0 = inlined_call_operand.vmem [shape: bf16[2,256,32], index: 0, kind: input, shape index: {}]
  %s1 = inlined_call_operand.vmem [shape: bf16[2,16,48], index: 1, kind: input, shape index: {}]
  %s2 = inlined_call_operand.vmem [shape: bf16[32,32], index: 2, kind: input, shape index: {}]
  %s3 = inlined_call_operand.vmem [shape: f32[1,32], index: 3, kind: input, shape index: {}]
  %s4 = inlined_call_operand.vmem [shape: bf16[48,32], index: 4, kind: input, shape index: {}]
  %s5 = inlined_call_operand.vmem [shape: f32[1,32], index: 5, kind: input, shape index: {}]
  %s6 = inlined_call_operand.vmem [shape: bf16[32,64], index: 6, kind: input, shape index: {}]
  %s7 = inlined_call_operand.vmem [shape: bf16[32,32], index: 7, kind: input, shape index: {}]
  %s8 = inlined_call_operand.vmem [shape: f32[1,32], index: 8, kind: input, shape index: {}]
  %s9 = inlined_call_operand.vmem [shape: f32[8,512], index: 9, kind: input, shape index: {}]
  %s10 = inlined_call_operand.vmem [shape: f32[2,256,32], index: 10, kind: output, shape index: {}]
  %s11 = sld [smem:[#allocation0]]
  $region73: #{tpu_custom_call.1} parent=0
    _
  %s13 = ssub.s32 1, %s11
  %s14 = scalar_select 0, %s13, %s11
  loop: start=0, step=1, limit=4
  $region2: #{tpu_custom_call.1} parent=0 // loop_pre_header
    _
  $region3: #{tpu_custom_call.1} parent=0 // loop_header
    %s16 = sphi 0, %s20
    %p17 = scmp.ge.s32.totalorder %s16, 4
    %s26 = sphi 0, %s28
    %s29 = sphi 0, %s26
    %s30 = sphi 0, %s29
    %s46 = sphi 0, %s30
    %s52 = sphi 0, %s54
    %s55 = sphi 0, %s52
    %s56 = sphi 0, %s55
    %s72 = sphi 0, %s56
    %s76 = sphi 0, %s76
    %s78 = sphi 0, %s76
    %s79 = sphi 0, %s78
    %s93 = sphi 0, %s79
    %s97 = sphi 0, %s97
    %s99 = sphi 0, %s97
    %s100 = sphi 0, %s99
    %s114 = sphi 0, %s100
    %s118 = sphi 0, %s118
    %s120 = sphi 0, %s118
    %s121 = sphi 0, %s120
    %s135 = sphi 0, %s121
    %s139 = sphi 0, %s139
    %s141 = sphi 0, %s139
    %s142 = sphi 0, %s141
    %s156 = sphi 0, %s142
    %s160 = sphi 0, %s160
    %s162 = sphi 0, %s160
    %s163 = sphi 0, %s162
    %s177 = sphi 0, %s163
    %s181 = sphi 0, %s181
    %s183 = sphi 0, %s181
    %s184 = sphi 0, %s183
    %s198 = sphi 0, %s184
    %s202 = sphi 0, %s202
    %s204 = sphi 0, %s202
    %s205 = sphi 0, %s204
    %s219 = sphi 0, %s205
    %s223 = sphi 0, %s223
    %s225 = sphi 0, %s223
    %s226 = sphi 0, %s225
    %s240 = sphi 0, %s226
    %s246 = sphi 0, %s248
    %s249 = sphi 0, %s246
    %s250 = sphi 0, %s249
    %s266 = sphi 0, %s250
  $region4: #{tpu_custom_call.1} parent=0 // loop_header_branch
    %19 = sbr.rel (%p17) target = $region8
  $region5: #{tpu_custom_call.1} parent=0 // loop_body
    %s21 = ssub.s32 %s16, 1
    %s22 = ssub.s32 %s16, 2
    %s23 = sadd.s32 %s16, 1
    %s24 = ssub.s32 %s16, %s23
    %p25 = scmp.eq.s32.totalorder %s24, 0
    %s27 = sadd.s32 %s26, 1
    %s28 = scalar_select %p25, %s26, %s27
    %p31 = pneg %p25
    %p32 = scmp.eq.s32.totalorder %s16, 1
    %p33 = por %p31, %p32
    %p34 = scmp.ne.s32.totalorder %s26, %s29
    %p35 = scmp.eq.s32.totalorder %s16, 0
    %p36 = por %p34, %p35
    %p37 = scmp.ne.s32.totalorder %s26, %s29
    %p38 = scmp.eq.s32.totalorder %s21, 1
    %p39 = por %p37, %p38
    %p40 = scmp.ne.s32.totalorder %s29, %s30
    %p41 = scmp.eq.s32.totalorder %s21, 0
    %p42 = por %p40, %p41
    %p43 = scmp.ne.s32.totalorder %s29, %s30
    %p44 = scmp.eq.s32.totalorder %s22, 1
    %p45 = por %p43, %p44
    %p47 = scmp.ne.s32.totalorder %s30, %s46
    %p48 = scmp.eq.s32.totalorder %s22, 0
    %p49 = por %p47, %p48
    %s50 = ssub.s32 %s16, %s23
    %p51 = scmp.eq.s32.totalorder %s50, 0
    %s53 = sadd.s32 %s52, 1
    %s54 = scalar_select %p51, %s52, %s53
    %p57 = pneg %p51
    %p58 = scmp.eq.s32.totalorder %s16, 1
    %p59 = por %p57, %p58
    %p60 = scmp.ne.s32.totalorder %s52, %s55
    %p61 = scmp.eq.s32.totalorder %s16, 0
    %p62 = por %p60, %p61
    %p63 = scmp.ne.s32.totalorder %s52, %s55
    %p64 = scmp.eq.s32.totalorder %s21, 1
    %p65 = por %p63, %p64
    %p66 = scmp.ne.s32.totalorder %s55, %s56
    %p67 = scmp.eq.s32.totalorder %s21, 0
    %p68 = por %p66, %p67
    %p69 = scmp.ne.s32.totalorder %s55, %s56
    %p70 = scmp.eq.s32.totalorder %s22, 1
    %p71 = por %p69, %p70
    %p73 = scmp.ne.s32.totalorder %s56, %s72
    %p74 = scmp.eq.s32.totalorder %s22, 0
    %p75 = por %p73, %p74
    %s77 = sadd.s32 %s76, 1
    %p80 = scmp.eq.s32.totalorder %s16, 1
    %p81 = scmp.ne.s32.totalorder %s76, %s78
    %p82 = scmp.eq.s32.totalorder %s16, 0
    %p83 = por %p81, %p82
    %p84 = scmp.ne.s32.totalorder %s76, %s78
    %p85 = scmp.eq.s32.totalorder %s21, 1
    %p86 = por %p84, %p85
    %p87 = scmp.ne.s32.totalorder %s78, %s79
    %p88 = scmp.eq.s32.totalorder %s21, 0
    %p89 = por %p87, %p88
    %p90 = scmp.ne.s32.totalorder %s78, %s79
    %p91 = scmp.eq.s32.totalorder %s22, 1
    %p92 = por %p90, %p91
    %p94 = scmp.ne.s32.totalorder %s79, %s93
    %p95 = scmp.eq.s32.totalorder %s22, 0
    %p96 = por %p94, %p95
    %s98 = sadd.s32 %s97, 1
    %p101 = scmp.eq.s32.totalorder %s16, 1
    %p102 = scmp.ne.s32.totalorder %s97, %s99
    %p103 = scmp.eq.s32.totalorder %s16, 0
    %p104 = por %p102, %p103
    %p105 = scmp.ne.s32.totalorder %s97, %s99
    %p106 = scmp.eq.s32.totalorder %s21, 1
    %p107 = por %p105, %p106
    %p108 = scmp.ne.s32.totalorder %s99, %s100
    %p109 = scmp.eq.s32.totalorder %s21, 0
    %p110 = por %p108, %p109
    %p111 = scmp.ne.s32.totalorder %s99, %s100
    %p112 = scmp.eq.s32.totalorder %s22, 1
    %p113 = por %p111, %p112
    %p115 = scmp.ne.s32.totalorder %s100, %s114
    %p116 = scmp.eq.s32.totalorder %s22, 0
    %p117 = por %p115, %p116
    %s119 = sadd.s32 %s118, 1
    %p122 = scmp.eq.s32.totalorder %s16, 1
    %p123 = scmp.ne.s32.totalorder %s118, %s120
    %p124 = scmp.eq.s32.totalorder %s16, 0
    %p125 = por %p123, %p124
    %p126 = scmp.ne.s32.totalorder %s118, %s120
    %p127 = scmp.eq.s32.totalorder %s21, 1
    %p128 = por %p126, %p127
    %p129 = scmp.ne.s32.totalorder %s120, %s121
    %p130 = scmp.eq.s32.totalorder %s21, 0
    %p131 = por %p129, %p130
    %p132 = scmp.ne.s32.totalorder %s120, %s121
    %p133 = scmp.eq.s32.totalorder %s22, 1
    %p134 = por %p132, %p133
    %p136 = scmp.ne.s32.totalorder %s121, %s135
    %p137 = scmp.eq.s32.totalorder %s22, 0
    %p138 = por %p136, %p137
    %s140 = sadd.s32 %s139, 1
    %p143 = scmp.eq.s32.totalorder %s16, 1
    %p144 = scmp.ne.s32.totalorder %s139, %s141
    %p145 = scmp.eq.s32.totalorder %s16, 0
    %p146 = por %p144, %p145
    %p147 = scmp.ne.s32.totalorder %s139, %s141
    %p148 = scmp.eq.s32.totalorder %s21, 1
    %p149 = por %p147, %p148
    %p150 = scmp.ne.s32.totalorder %s141, %s142
    %p151 = scmp.eq.s32.totalorder %s21, 0
    %p152 = por %p150, %p151
    %p153 = scmp.ne.s32.totalorder %s141, %s142
    %p154 = scmp.eq.s32.totalorder %s22, 1
    %p155 = por %p153, %p154
    %p157 = scmp.ne.s32.totalorder %s142, %s156
    %p158 = scmp.eq.s32.totalorder %s22, 0
    %p159 = por %p157, %p158
    %s161 = sadd.s32 %s160, 1
    %p164 = scmp.eq.s32.totalorder %s16, 1
    %p165 = scmp.ne.s32.totalorder %s160, %s162
    %p166 = scmp.eq.s32.totalorder %s16, 0
    %p167 = por %p165, %p166
    %p168 = scmp.ne.s32.totalorder %s160, %s162
    %p169 = scmp.eq.s32.totalorder %s21, 1
    %p170 = por %p168, %p169
    %p171 = scmp.ne.s32.totalorder %s162, %s163
    %p172 = scmp.eq.s32.totalorder %s21, 0
    %p173 = por %p171, %p172
    %p174 = scmp.ne.s32.totalorder %s162, %s163
    %p175 = scmp.eq.s32.totalorder %s22, 1
    %p176 = por %p174, %p175
    %p178 = scmp.ne.s32.totalorder %s163, %s177
    %p179 = scmp.eq.s32.totalorder %s22, 0
    %p180 = por %p178, %p179
    %s182 = sadd.s32 %s181, 1
    %p185 = scmp.eq.s32.totalorder %s16, 1
    %p186 = scmp.ne.s32.totalorder %s181, %s183
    %p187 = scmp.eq.s32.totalorder %s16, 0
    %p188 = por %p186, %p187
    %p189 = scmp.ne.s32.totalorder %s181, %s183
    %p190 = scmp.eq.s32.totalorder %s21, 1
    %p191 = por %p189, %p190
    %p192 = scmp.ne.s32.totalorder %s183, %s184
    %p193 = scmp.eq.s32.totalorder %s21, 0
    %p194 = por %p192, %p193
    %p195 = scmp.ne.s32.totalorder %s183, %s184
    %p196 = scmp.eq.s32.totalorder %s22, 1
    %p197 = por %p195, %p196
    %p199 = scmp.ne.s32.totalorder %s184, %s198
    %p200 = scmp.eq.s32.totalorder %s22, 0
    %p201 = por %p199, %p200
    %s203 = sadd.s32 %s202, 1
    %p206 = scmp.eq.s32.totalorder %s16, 1
    %p207 = scmp.ne.s32.totalorder %s202, %s204
    %p208 = scmp.eq.s32.totalorder %s16, 0
    %p209 = por %p207, %p208
    %p210 = scmp.ne.s32.totalorder %s202, %s204
    %p211 = scmp.eq.s32.totalorder %s21, 1
    %p212 = por %p210, %p211
    %p213 = scmp.ne.s32.totalorder %s204, %s205
    %p214 = scmp.eq.s32.totalorder %s21, 0
    %p215 = por %p213, %p214
    %p216 = scmp.ne.s32.totalorder %s204, %s205
    %p217 = scmp.eq.s32.totalorder %s22, 1
    %p218 = por %p216, %p217
    %p220 = scmp.ne.s32.totalorder %s205, %s219
    %p221 = scmp.eq.s32.totalorder %s22, 0
    %p222 = por %p220, %p221
    %s224 = sadd.s32 %s223, 1
    %p227 = scmp.eq.s32.totalorder %s16, 1
    %p228 = scmp.ne.s32.totalorder %s223, %s225
    %p229 = scmp.eq.s32.totalorder %s16, 0
    %p230 = por %p228, %p229
    %p231 = scmp.ne.s32.totalorder %s223, %s225
    %p232 = scmp.eq.s32.totalorder %s21, 1
    %p233 = por %p231, %p232
    %p234 = scmp.ne.s32.totalorder %s225, %s226
    %p235 = scmp.eq.s32.totalorder %s21, 0
    %p236 = por %p234, %p235
    %p237 = scmp.ne.s32.totalorder %s225, %s226
    %p238 = scmp.eq.s32.totalorder %s22, 1
    %p239 = por %p237, %p238
    %p241 = scmp.ne.s32.totalorder %s226, %s240
    %p242 = scmp.eq.s32.totalorder %s22, 0
    %p243 = por %p241, %p242
    %s244 = ssub.s32 %s16, %s23
    %p245 = scmp.eq.s32.totalorder %s244, 0
    %s247 = sadd.s32 %s246, 1
    %s248 = scalar_select %p245, %s246, %s247
    %p251 = pneg %p245
    %p252 = scmp.eq.s32.totalorder %s16, 1
    %p253 = por %p251, %p252
    %p254 = scmp.ne.s32.totalorder %s246, %s249
    %p255 = scmp.eq.s32.totalorder %s16, 0
    %p256 = por %p254, %p255
    %p257 = scmp.ne.s32.totalorder %s246, %s249
    %p258 = scmp.eq.s32.totalorder %s21, 1
    %p259 = por %p257, %p258
    %p260 = scmp.ne.s32.totalorder %s249, %s250
    %p261 = scmp.eq.s32.totalorder %s21, 0
    %p262 = por %p260, %p261
    %p263 = scmp.ne.s32.totalorder %s249, %s250
    %p264 = scmp.eq.s32.totalorder %s22, 1
    %p265 = por %p263, %p264
    %p267 = scmp.ne.s32.totalorder %s250, %s266
    %p268 = scmp.eq.s32.totalorder %s22, 0
    %p269 = por %p267, %p268
    %p270 = scmp.le.s32.totalorder 1, %s16
    %p271 = scmp.lt.s32.totalorder %s16, 3
    %p272 = pnand %p270, %p271
    %p273 = pneg %p272
    // Predicated region
    $region9: #{tpu_custom_call.1} parent=5 // pred_check
      _
    $region10: #{tpu_custom_call.1} parent=5 // pred_check_branch
      %275 = sbr.rel (%p272) target = $region12
    $region11: #{tpu_custom_call.1} parent=5 // pred_region
      %s276 = ssub.s32 %s16, 1
      // Predicated region
      $region13: #{tpu_custom_call.1} parent=11 // pred_check
        %p277 = pneg %p89
      $region14: #{tpu_custom_call.1} parent=11 // pred_check_branch
        %279 = sbr.rel (%p277) target = $region16
      $region15: #{tpu_custom_call.1} parent=11 // pred_region
        _
      $region16: #{tpu_custom_call.1} parent=11 // pred_fallthru
        _
      // Predicated region
      $region17: #{tpu_custom_call.1} parent=11 // pred_check
        %p280 = pneg %p110
      $region18: #{tpu_custom_call.1} parent=11 // pred_check_branch
        %282 = sbr.rel (%p280) target = $region20
      $region19: #{tpu_custom_call.1} parent=11 // pred_region
        _
      $region20: #{tpu_custom_call.1} parent=11 // pred_fallthru
        _
      // Predicated region
      $region21: #{tpu_custom_call.1} parent=11 // pred_check
        %p283 = pneg %p131
      $region22: #{tpu_custom_call.1} parent=11 // pred_check_branch
        %285 = sbr.rel (%p283) target = $region24
      $region23: #{tpu_custom_call.1} parent=11 // pred_region
        _
      $region24: #{tpu_custom_call.1} parent=11 // pred_fallthru
        _
      // Predicated region
      $region25: #{tpu_custom_call.1} parent=11 // pred_check
        %p286 = pneg %p152
      $region26: #{tpu_custom_call.1} parent=11 // pred_check_branch
        %288 = sbr.rel (%p286) target = $region28
      $region27: #{tpu_custom_call.1} parent=11 // pred_region
        _
      $region28: #{tpu_custom_call.1} parent=11 // pred_fallthru
        _
      // Predicated region
      $region29: #{tpu_custom_call.1} parent=11 // pred_check
        %p289 = pneg %p173
      $region30: #{tpu_custom_call.1} parent=11 // pred_check_branch
        %291 = sbr.rel (%p289) target = $region32
      $region31: #{tpu_custom_call.1} parent=11 // pred_region
        _
      $region32: #{tpu_custom_call.1} parent=11 // pred_fallthru
        _
      // Predicated region
      $region33: #{tpu_custom_call.1} parent=11 // pred_check
        %p292 = pneg %p194
      $region34: #{tpu_custom_call.1} parent=11 // pred_check_branch
        %294 = sbr.rel (%p292) target = $region36
      $region35: #{tpu_custom_call.1} parent=11 // pred_region
        _
      $region36: #{tpu_custom_call.1} parent=11 // pred_fallthru
        _
      // Predicated region
      $region37: #{tpu_custom_call.1} parent=11 // pred_check
        %p295 = pneg %p215
      $region38: #{tpu_custom_call.1} parent=11 // pred_check_branch
        %297 = sbr.rel (%p295) target = $region40
      $region39: #{tpu_custom_call.1} parent=11 // pred_region
        _
      $region40: #{tpu_custom_call.1} parent=11 // pred_fallthru
        _
      // Predicated region
      $region41: #{tpu_custom_call.1} parent=11 // pred_check
        %p298 = pneg %p236
      $region42: #{tpu_custom_call.1} parent=11 // pred_check_branch
        %300 = sbr.rel (%p298) target = $region44
      $region43: #{tpu_custom_call.1} parent=11 // pred_region
        _
      $region44: #{tpu_custom_call.1} parent=11 // pred_fallthru
        _
    $region12: #{tpu_custom_call.1} parent=5 // pred_fallthru
      _
    %p301 = scmp.lt.s32.totalorder %s16, 2
    // Predicated region
    $region45: #{tpu_custom_call.1} parent=5 // pred_check
      %p302 = pneg %p301
    $region46: #{tpu_custom_call.1} parent=5 // pred_check_branch
      %304 = sbr.rel (%p302) target = $region48
    $region47: #{tpu_custom_call.1} parent=5 // pred_region
      // Predicated region
      $region49: #{tpu_custom_call.1} parent=47 // pred_check
        %p305 = pneg %p36
      $region50: #{tpu_custom_call.1} parent=47 // pred_check_branch
        %307 = sbr.rel (%p305) target = $region52
      $region51: #{tpu_custom_call.1} parent=47 // pred_region
        %p308 = scmp.lt.s32.totalorder %s16, 1
        %s309 = scalar_select %p308, %s16, 1
        %s310 = smul.addr %s309, 32
        %s311 = smul.addr %s310, 4
        %s312 = scalar_lea.vmem %s0, %s311
      $region52: #{tpu_custom_call.1} parent=47 // pred_fallthru
        _
      // Predicated region
      $region53: #{tpu_custom_call.1} parent=47 // pred_check
        %p313 = pneg %p62
      $region54: #{tpu_custom_call.1} parent=47 // pred_check_branch
        %315 = sbr.rel (%p313) target = $region56
      $region55: #{tpu_custom_call.1} parent=47 // pred_region
        %p316 = scmp.lt.s32.totalorder %s16, 1
        %s317 = scalar_select %p316, %s16, 1
        %s318 = smul.addr %s317, 2
        %s319 = smul.addr %s318, 4
        %s320 = scalar_lea.vmem %s1, %s319
      $region56: #{tpu_custom_call.1} parent=47 // pred_fallthru
        _
    $region48: #{tpu_custom_call.1} parent=5 // pred_fallthru
      _
    %p321 = scmp.le.s32.totalorder 1, %s16
    %p322 = scmp.lt.s32.totalorder %s16, 3
    %p323 = pnand %p321, %p322
    %p324 = pneg %p323
    // Predicated region
    $region57: #{tpu_custom_call.1} parent=5 // pred_check
      _
    $region58: #{tpu_custom_call.1} parent=5 // pred_check_branch
      %326 = sbr.rel (%p323) target = $region60
    $region59: #{tpu_custom_call.1} parent=5 // pred_region
      %s327 = ssub.s32 %s16, 1
      %p328 = scmp.lt.s32.totalorder %s21, 1
      %s329 = scalar_select %p328, %s21, 1
      %s330 = smul.addr %s329, 32
      %s331 = smul.addr %s330, 4
      %s332 = scalar_lea.vmem %s0, %s331
      %p333 = pneg %p42
      %p334 = pneg %p39
      %p335 = scmp.lt.s32.totalorder %s21, 1
      %s336 = scalar_select %p335, %s21, 1
      %s337 = smul.addr %s336, 2
      %s338 = smul.addr %s337, 4
      %s339 = scalar_lea.vmem %s1, %s338
      %p340 = pneg %p68
      %p341 = pneg %p65
      %p342 = pneg %p89
      %p343 = pneg %p86
      %p344 = pneg %p110
      %p345 = pneg %p107
      %p346 = pneg %p131
      %p347 = pneg %p128
      %p348 = pneg %p152
      %p349 = pneg %p149
      %p350 = pneg %p173
      %p351 = pneg %p170
      %p352 = pneg %p194
      %p353 = pneg %p191
      %p354 = pneg %p215
      %p355 = pneg %p212
      %p356 = pneg %p236
      %p357 = pneg %p233
      %p358 = pneg %p262
      %p359 = pneg %p259
      %p360 = scmp.lt.s32.totalorder %s21, 1
      %s361 = scalar_select %p360, %s21, 1
      %s362 = smul.addr %s361, 32
      %s363 = smul.addr %s362, 8
      %s364 = scalar_lea.vmem %s10, %s363
      %p365 = scmp.lt.s32.totalorder %s21, 1
      %s366 = scalar_select %p365, %s21, 1
      %s367 = smul.addr %s366, 32
      %s368 = smul.addr %s367, 4
      %s369 = scalar_lea.vmem %s0, %s368
      %p370 = scmp.lt.s32.totalorder %s21, 1
      %s371 = scalar_select %p370, %s21, 1
      %s372 = smul.addr %s371, 2
      %s373 = smul.addr %s372, 4
      %s374 = scalar_lea.vmem %s1, %s373
      %p375 = scmp.lt.s32.totalorder %s21, 1
      %s376 = scalar_select %p375, %s21, 1
      %s377 = smul.addr %s376, 32
      %s378 = smul.addr %s377, 8
      %s379 = scalar_lea.vmem %s10, %s378
      %v381 = vld [vmem:[%s369] sm:$0xf]
      %v382 = vld [vmem:[%s369 + $0x4] sm:$0xf]
      %v383 = vld [vmem:[%s369 + $0x8] sm:$0xf]
      %v384 = vld [vmem:[%s369 + $0xc] sm:$0xf]
      %v385 = vld [vmem:[%s369 + $0x10] sm:$0xf]
      %v386 = vld [vmem:[%s369 + $0x14] sm:$0xf]
      %v387 = vld [vmem:[%s369 + $0x18] sm:$0xf]
      %v388 = vld [vmem:[%s369 + $0x1c] sm:$0xf]
      %v389 = vld [vmem:[%s369 + $0x20] sm:$0xf]
      %v390 = vld [vmem:[%s369 + $0x24] sm:$0xf]
      %v391 = vld [vmem:[%s369 + $0x28] sm:$0xf]
      %v392 = vld [vmem:[%s369 + $0x2c] sm:$0xf]
      %v393 = vld [vmem:[%s369 + $0x30] sm:$0xf]
      %v394 = vld [vmem:[%s369 + $0x34] sm:$0xf]
      %v395 = vld [vmem:[%s369 + $0x38] sm:$0xf]
      %v396 = vld [vmem:[%s369 + $0x3c] sm:$0xf]
      %v397 = vld [vmem:[%s369 + $0x40] sm:$0xf]
      %v398 = vld [vmem:[%s369 + $0x44] sm:$0xf]
      %v399 = vld [vmem:[%s369 + $0x48] sm:$0xf]
      %v400 = vld [vmem:[%s369 + $0x4c] sm:$0xf]
      %v401 = vld [vmem:[%s369 + $0x50] sm:$0xf]
      %v402 = vld [vmem:[%s369 + $0x54] sm:$0xf]
      %v403 = vld [vmem:[%s369 + $0x58] sm:$0xf]
      %v404 = vld [vmem:[%s369 + $0x5c] sm:$0xf]
      %v405 = vld [vmem:[%s369 + $0x60] sm:$0xf]
      %v406 = vld [vmem:[%s369 + $0x64] sm:$0xf]
      %v407 = vld [vmem:[%s369 + $0x68] sm:$0xf]
      %v408 = vld [vmem:[%s369 + $0x6c] sm:$0xf]
      %v409 = vld [vmem:[%s369 + $0x70] sm:$0xf]
      %v410 = vld [vmem:[%s369 + $0x74] sm:$0xf]
      %v411 = vld [vmem:[%s369 + $0x78] sm:$0xf]
      %v412 = vld [vmem:[%s369 + $0x7c] sm:$0xf]
      %v413 = vld [vmem:[%s2] sm:$0xf]
      %v414 = vld [vmem:[%s2 + $0x4] sm:$0xf]
      %v415 = vld [vmem:[%s2 + $0x8] sm:$0xf]
      %v416 = vld [vmem:[%s2 + $0xc] sm:$0xf]
      %v417 = vld [vmem:[%s3] sm:$0x1]
      %v419 = vperm.slane %v417, 0
      %v453 = vunpack.c.l.b16 %v381
      %v454 = vunpack.c.l.b16 %v382
      %v455 = vunpack.c.l.b16 %v383
      %v456 = vunpack.c.l.b16 %v384
      %v457 = vunpack.c.l.b16 %v385
      %v458 = vunpack.c.l.b16 %v386
      %v459 = vunpack.c.l.b16 %v387
      %v460 = vunpack.c.l.b16 %v388
      %v461 = vunpack.c.l.b16 %v389
      %v462 = vunpack.c.l.b16 %v390
      %v463 = vunpack.c.l.b16 %v391
      %v464 = vunpack.c.l.b16 %v392
      %v465 = vunpack.c.l.b16 %v393
      %v466 = vunpack.c.l.b16 %v394
      %v467 = vunpack.c.l.b16 %v395
      %v468 = vunpack.c.l.b16 %v396
      %v469 = vunpack.c.l.b16 %v397
      %v470 = vunpack.c.l.b16 %v398
      %v471 = vunpack.c.l.b16 %v399
      %v472 = vunpack.c.l.b16 %v400
      %v473 = vunpack.c.l.b16 %v401
      %v474 = vunpack.c.l.b16 %v402
      %v475 = vunpack.c.l.b16 %v403
      %v476 = vunpack.c.l.b16 %v404
      %v477 = vunpack.c.l.b16 %v405
      %v478 = vunpack.c.l.b16 %v406
      %v479 = vunpack.c.l.b16 %v407
      %v480 = vunpack.c.l.b16 %v408
      %v481 = vunpack.c.l.b16 %v409
      %v482 = vunpack.c.l.b16 %v410
      %v483 = vunpack.c.l.b16 %v411
      %v484 = vunpack.c.l.b16 %v412
      %v485 = vpack.c.b16 %v454, %v453
      %v486 = vpack.c.b16 %v456, %v455
      %v487 = vpack.c.b16 %v458, %v457
      %v488 = vpack.c.b16 %v460, %v459
      %v489 = vpack.c.b16 %v462, %v461
      %v490 = vpack.c.b16 %v464, %v463
      %v491 = vpack.c.b16 %v466, %v465
      %v492 = vpack.c.b16 %v468, %v467
      %v493 = vpack.c.b16 %v470, %v469
      %v494 = vpack.c.b16 %v472, %v471
      %v495 = vpack.c.b16 %v474, %v473
      %v496 = vpack.c.b16 %v476, %v475
      %v497 = vpack.c.b16 %v478, %v477
      %v498 = vpack.c.b16 %v480, %v479
      %v499 = vpack.c.b16 %v482, %v481
      %v500 = vpack.c.b16 %v484, %v483
      %v505 = vunpack.c.l.b16 %v413
      %v506 = vunpack.c.l.b16 %v414
      %v507 = vunpack.c.l.b16 %v415
      %v508 = vunpack.c.l.b16 %v416
      %v509 = vpack.c.b16 %v506, %v505
      %v510 = vpack.c.b16 %v508, %v507
      %vm513 = vcmask 261120
      %v515 = vsel %vm513, %v485, 0
      %v518 = vsel %vm513, %v486, 0
      %v521 = vsel %vm513, %v487, 0
      %v524 = vsel %vm513, %v488, 0
      %v527 = vsel %vm513, %v489, 0
      %v530 = vsel %vm513, %v490, 0
      %v533 = vsel %vm513, %v491, 0
      %v536 = vsel %vm513, %v492, 0
      %v539 = vsel %vm513, %v493, 0
      %v542 = vsel %vm513, %v494, 0
      %v545 = vsel %vm513, %v495, 0
      %v548 = vsel %vm513, %v496, 0
      %v551 = vsel %vm513, %v497, 0
      %v554 = vsel %vm513, %v498, 0
      %v557 = vsel %vm513, %v499, 0
      %v560 = vsel %vm513, %v500, 0
      %562 = vmatpush.bf16.msra.mxu0 0
      %563 = vmatpush.bf16.msra.mxu0 0
      %564 = vmatpush.bf16.msra.mxu0 0
      %565 = vmatpush.bf16.msra.mxu0 0
      %566 = vmatpush.bf16.msra.mxu0 0
      %567 = vmatpush.bf16.msra.mxu0 0
      %568 = vmatpush.bf16.msra.mxu0 %v510
      %569 = vmatpush.bf16.msra.mxu0 %v509
      %570 = vmatmul.bf16.gmra.mxu0 %v515
      %v571 = vpop.f32.mrf.mxu0
      %v572 = vadd.f32 %v419, %v571
      %v573 = vpop.f32.mrf.mxu0
      %v574 = vadd.f32 %v419, %v573
      %575 = vmatmul.bf16.gmra.mxu0 %v518
      %v576 = vpop.f32.mrf.mxu0
      %v577 = vadd.f32 %v419, %v576
      %v578 = vpop.f32.mrf.mxu0
      %v579 = vadd.f32 %v419, %v578
      %580 = vmatmul.bf16.gmra.mxu0 %v521
      %v581 = vpop.f32.mrf.mxu0
      %v582 = vadd.f32 %v419, %v581
      %v583 = vpop.f32.mrf.mxu0
      %v584 = vadd.f32 %v419, %v583
      %585 = vmatmul.bf16.gmra.mxu0 %v524
      %v586 = vpop.f32.mrf.mxu0
      %v587 = vadd.f32 %v419, %v586
      %v588 = vpop.f32.mrf.mxu0
      %v589 = vadd.f32 %v419, %v588
      %590 = vmatmul.bf16.gmra.mxu0 %v527
      %v591 = vpop.f32.mrf.mxu0
      %v592 = vadd.f32 %v419, %v591
      %v593 = vpop.f32.mrf.mxu0
      %v594 = vadd.f32 %v419, %v593
      %595 = vmatmul.bf16.gmra.mxu0 %v530
      %v596 = vpop.f32.mrf.mxu0
      %v597 = vadd.f32 %v419, %v596
      %v598 = vpop.f32.mrf.mxu0
      %v599 = vadd.f32 %v419, %v598
      %600 = vmatmul.bf16.gmra.mxu0 %v533
      %v601 = vpop.f32.mrf.mxu0
      %v602 = vadd.f32 %v419, %v601
      %v603 = vpop.f32.mrf.mxu0
      %v604 = vadd.f32 %v419, %v603
      %605 = vmatmul.bf16.gmra.mxu0 %v536
      %v606 = vpop.f32.mrf.mxu0
      %v607 = vadd.f32 %v419, %v606
      %v608 = vpop.f32.mrf.mxu0
      %v609 = vadd.f32 %v419, %v608
      %610 = vmatmul.bf16.gmra.mxu0 %v539
      %v611 = vpop.f32.mrf.mxu0
      %v612 = vadd.f32 %v419, %v611
      %v613 = vpop.f32.mrf.mxu0
      %v614 = vadd.f32 %v419, %v613
      %615 = vmatmul.bf16.gmra.mxu0 %v542
      %v616 = vpop.f32.mrf.mxu0
      %v617 = vadd.f32 %v419, %v616
      %v618 = vpop.f32.mrf.mxu0
      %v619 = vadd.f32 %v419, %v618
      %620 = vmatmul.bf16.gmra.mxu0 %v545
      %v621 = vpop.f32.mrf.mxu0
      %v622 = vadd.f32 %v419, %v621
      %v623 = vpop.f32.mrf.mxu0
      %v624 = vadd.f32 %v419, %v623
      %625 = vmatmul.bf16.gmra.mxu0 %v548
      %v626 = vpop.f32.mrf.mxu0
      %v627 = vadd.f32 %v419, %v626
      %v628 = vpop.f32.mrf.mxu0
      %v629 = vadd.f32 %v419, %v628
      %630 = vmatmul.bf16.gmra.mxu0 %v551
      %v631 = vpop.f32.mrf.mxu0
      %v632 = vadd.f32 %v419, %v631
      %v633 = vpop.f32.mrf.mxu0
      %v634 = vadd.f32 %v419, %v633
      %635 = vmatmul.bf16.gmra.mxu0 %v554
      %v636 = vpop.f32.mrf.mxu0
      %v637 = vadd.f32 %v419, %v636
      %v638 = vpop.f32.mrf.mxu0
      %v639 = vadd.f32 %v419, %v638
      %640 = vmatmul.bf16.gmra.mxu0 %v557
      %v641 = vpop.f32.mrf.mxu0
      %v642 = vadd.f32 %v419, %v641
      %v643 = vpop.f32.mrf.mxu0
      %v644 = vadd.f32 %v419, %v643
      %645 = vmatmul.bf16.gmra.mxu0 %v560
      %v646 = vpop.f32.mrf.mxu0
      %v647 = vadd.f32 %v419, %v646
      %v648 = vpop.f32.mrf.mxu0
      %v649 = vadd.f32 %v419, %v648
      %650 = vdwg.mxu0
      %653 = vrot.lane.b32.xlu0 %v577, 32
      %v654 = vpop.permute.xlu0 %653
      %655 = vrot.lane.b32.xlu0 %v579, 32
      %v656 = vpop.permute.xlu0 %655
      %661 = vrot.lane.b32.xlu0 %v582, 64
      %v662 = vpop.permute.xlu0 %661
      %663 = vrot.lane.b32.xlu0 %v584, 64
      %v664 = vpop.permute.xlu0 %663
      %669 = vrot.lane.b32.xlu0 %v587, 96
      %v670 = vpop.permute.xlu0 %669
      %671 = vrot.lane.b32.xlu0 %v589, 96
      %v672 = vpop.permute.xlu0 %671
      %677 = vrot.lane.b32.xlu0 %v597, 32
      %v678 = vpop.permute.xlu0 %677
      %679 = vrot.lane.b32.xlu0 %v599, 32
      %v680 = vpop.permute.xlu0 %679
      %685 = vrot.lane.b32.xlu0 %v602, 64
      %v686 = vpop.permute.xlu0 %685
      %687 = vrot.lane.b32.xlu0 %v604, 64
      %v688 = vpop.permute.xlu0 %687
      %693 = vrot.lane.b32.xlu0 %v607, 96
      %v694 = vpop.permute.xlu0 %693
      %695 = vrot.lane.b32.xlu0 %v609, 96
      %v696 = vpop.permute.xlu0 %695
      %701 = vrot.lane.b32.xlu0 %v617, 32
      %v702 = vpop.permute.xlu0 %701
      %703 = vrot.lane.b32.xlu0 %v619, 32
      %v704 = vpop.permute.xlu0 %703
      %709 = vrot.lane.b32.xlu0 %v622, 64
      %v710 = vpop.permute.xlu0 %709
      %711 = vrot.lane.b32.xlu0 %v624, 64
      %v712 = vpop.permute.xlu0 %711
      %717 = vrot.lane.b32.xlu0 %v627, 96
      %v718 = vpop.permute.xlu0 %717
      %719 = vrot.lane.b32.xlu0 %v629, 96
      %v720 = vpop.permute.xlu0 %719
      %725 = vrot.lane.b32.xlu0 %v637, 32
      %v726 = vpop.permute.xlu0 %725
      %727 = vrot.lane.b32.xlu0 %v639, 32
      %v728 = vpop.permute.xlu0 %727
      %733 = vrot.lane.b32.xlu0 %v642, 64
      %v734 = vpop.permute.xlu0 %733
      %735 = vrot.lane.b32.xlu0 %v644, 64
      %v736 = vpop.permute.xlu0 %735
      %741 = vrot.lane.b32.xlu0 %v647, 96
      %v742 = vpop.permute.xlu0 %741
      %743 = vrot.lane.b32.xlu0 %v649, 96
      %v744 = vpop.permute.xlu0 %743
      %v747 = vsel %vm513, %v572, %v654
      %v748 = vsel %vm513, %v574, %v656
      %vm749 = vcmask 523264
      %v750 = vsel %vm749, %v747, %v662
      %v751 = vsel %vm749, %v748, %v664
      %vm752 = vcmask 785408
      %v753 = vsel %vm752, %v750, %v670
      %v754 = vsel %vm752, %v751, %v672
      %v755 = vsel %vm513, %v592, %v678
      %v756 = vsel %vm513, %v594, %v680
      %v757 = vsel %vm749, %v755, %v686
      %v758 = vsel %vm749, %v756, %v688
      %v759 = vsel %vm752, %v757, %v694
      %v760 = vsel %vm752, %v758, %v696
      %v761 = vsel %vm513, %v612, %v702
      %v762 = vsel %vm513, %v614, %v704
      %v763 = vsel %vm749, %v761, %v710
      %v764 = vsel %vm749, %v762, %v712
      %v765 = vsel %vm752, %v763, %v718
      %v766 = vsel %vm752, %v764, %v720
      %v767 = vsel %vm513, %v632, %v726
      %v768 = vsel %vm513, %v634, %v728
      %v769 = vsel %vm749, %v767, %v734
      %v770 = vsel %vm749, %v768, %v736
      %v771 = vsel %vm752, %v769, %v742
      %v772 = vsel %vm752, %v770, %v744
      %v773 = vld [vmem:[%s374] sm:$0xf]
      %v774 = vld [vmem:[%s374 + $0x4] sm:$0xf]
      %v775 = vld [vmem:[%s4] sm:$0xf]
      %v776 = vld [vmem:[%s4 + $0x4] sm:$0xf]
      %v777 = vld [vmem:[%s4 + $0x8] sm:$0xf]
      %v778 = vld [vmem:[%s4 + $0xc] sm:$0xf]
      %v779 = vld [vmem:[%s4 + $0x10] sm:$0xf]
      %v780 = vld [vmem:[%s4 + $0x14] sm:$0xf]
      %v781 = vld [vmem:[%s5] sm:$0x1]
      %v783 = vperm.slane %v781, 0
      %v787 = vunpack.c.l.b16 %v773
      %v788 = vunpack.c.l.b16 %v774
      %v789 = vpack.c.b16 %v788, %v787
      %v796 = vunpack.c.l.b16 %v775
      %v797 = vunpack.c.l.b16 %v776
      %v798 = vunpack.c.l.b16 %v777
      %v799 = vunpack.c.l.b16 %v778
      %v800 = vunpack.c.l.b16 %v779
      %v801 = vunpack.c.l.b16 %v780
      %v802 = vpack.c.b16 %v797, %v796
      %v803 = vpack.c.b16 %v799, %v798
      %v804 = vpack.c.b16 %v801, %v800
      %vm808 = vcmask 392192
      %v810 = vsel %vm808, %v789, 0
      %812 = vmatpush.bf16.msra.mxu0 0
      %813 = vmatpush.bf16.msra.mxu0 0
      %814 = vmatpush.bf16.msra.mxu0 0
      %815 = vmatpush.bf16.msra.mxu0 0
      %816 = vmatpush.bf16.msra.mxu0 0
      %817 = vmatpush.bf16.msra.mxu0 %v804
      %818 = vmatpush.bf16.msra.mxu0 %v803
      %819 = vmatpush.bf16.msra.mxu0 %v802
      %820 = vmatmul.bf16.gmra.mxu0 %v810
      %v821 = vpop.f32.mrf.mxu0
      %v822 = vadd.f32 %v783, %v821
      %v823 = vpop.f32.mrf.mxu0
      %v824 = vadd.f32 %v783, %v823
      %825 = vdwg.mxu0
      %v826 = vpack.c.bf16 %v824, %v822
      %v827 = vld [vmem:[%s6] sm:$0xf]
      %v828 = vld [vmem:[%s6 + $0x4] sm:$0xf]
      %v829 = vld [vmem:[%s6 + $0x8] sm:$0xf]
      %v830 = vld [vmem:[%s6 + $0xc] sm:$0xf]
      %v835 = vunpack.c.l.b16 %v827
      %v836 = vunpack.c.l.b16 %v828
      %v837 = vunpack.c.l.b16 %v829
      %v838 = vunpack.c.l.b16 %v830
      %v839 = vpack.c.b16 %v836, %v835
      %v840 = vpack.c.b16 %v838, %v837
      %v844 = vsel %vm513, %v826, 0
      %846 = vmatpush.bf16.msra.mxu0 0
      %847 = vmatpush.bf16.msra.mxu0 0
      %848 = vmatpush.bf16.msra.mxu0 0
      %849 = vmatpush.bf16.msra.mxu0 0
      %850 = vmatpush.bf16.msra.mxu0 0
      %851 = vmatpush.bf16.msra.mxu0 0
      %852 = vmatpush.bf16.msra.mxu0 %v840
      %853 = vmatpush.bf16.msra.mxu0 %v839
      %854 = vmatmul.bf16.gmra.mxu0 %v844
      %v855 = vpop.f32.mrf.mxu0
      %v856 = vadd.f32 0.0, %v855
      %v857 = vpop.f32.mrf.mxu0
      %v858 = vadd.f32 0.0, %v857
      %859 = vdwg.mxu0
      %v860 = vld [vmem:[%s9] sm:$0xff]
      %v861 = vld [vmem:[%s9 + $0x8] sm:$0xff]
      %v862 = vld [vmem:[%s9 + $0x10] sm:$0xff]
      %v863 = vld [vmem:[%s9 + $0x18] sm:$0xff]
      %v864 = vperm.slane %v860, 0
      %v865 = vmul.f32 %v856, %v864
      %v866 = vmul.f32 %v858, %v864
      %v867 = vperm.slane %v860, 1
      %v868 = vmul.f32 %v856, %v867
      %v869 = vmul.f32 %v858, %v867
      %v870 = vperm.slane %v860, 2
      %v871 = vmul.f32 %v856, %v870
      %v872 = vmul.f32 %v858, %v870
      %v873 = vperm.slane %v860, 3
      %v874 = vmul.f32 %v856, %v873
      %v875 = vmul.f32 %v858, %v873
      %v876 = vperm.slane %v860, 4
      %v877 = vmul.f32 %v856, %v876
      %v878 = vmul.f32 %v858, %v876
      %v879 = vperm.slane %v860, 5
      %v880 = vmul.f32 %v856, %v879
      %v881 = vmul.f32 %v858, %v879
      %v882 = vperm.slane %v860, 6
      %v883 = vmul.f32 %v856, %v882
      %v884 = vmul.f32 %v858, %v882
      %v885 = vperm.slane %v860, 7
      %v886 = vmul.f32 %v856, %v885
      %v887 = vmul.f32 %v858, %v885
      %v888 = vpack.c.bf16 %v866, %v865
      %v889 = vpack.c.bf16 %v869, %v868
      %v890 = vpack.c.bf16 %v872, %v871
      %v891 = vpack.c.bf16 %v875, %v874
      %v892 = vpack.c.bf16 %v878, %v877
      %v893 = vpack.c.bf16 %v881, %v880
      %v894 = vpack.c.bf16 %v884, %v883
      %v895 = vpack.c.bf16 %v887, %v886
      %v896 = vpack.c.bf16 %v858, %v856
      %898 = vrot.lane.b32.xlu0 %v896, 96
      %v899 = vpop.permute.xlu0 %898
      %v901 = vsel %vm513, %v888, 0
      %v904 = vsel %vm513, %v889, 0
      %v907 = vsel %vm513, %v890, 0
      %v910 = vsel %vm513, %v891, 0
      %v913 = vsel %vm513, %v892, 0
      %v916 = vsel %vm513, %v893, 0
      %v919 = vsel %vm513, %v894, 0
      %v922 = vsel %vm513, %v895, 0
      %v925 = vsel %vm513, %v899, 0
      %927 = vmatpush.bf16.xpose.msra.mxu0 0
      %928 = vmatpush.bf16.xpose.msra.mxu0 0
      %929 = vmatpush.bf16.xpose.msra.mxu0 0
      %930 = vmatpush.bf16.xpose.msra.mxu0 0
      %931 = vmatpush.bf16.xpose.msra.mxu0 0
      %932 = vmatpush.bf16.xpose.msra.mxu0 0
      %933 = vmatpush.bf16.xpose.msra.mxu0 0
      %934 = vmatpush.bf16.xpose.msra.mxu0 %v925
      %935 = vmatmul.bf16.gmra.mxu0 %v901
      %v936 = vpop.f32.mrf.mxu0
      %v937 = vadd.f32 0.0, %v936
      %v938 = vpop.f32.mrf.mxu0
      %v939 = vadd.f32 0.0, %v938
      %940 = vmatmul.bf16.gmra.mxu0 %v904
      %v941 = vpop.f32.mrf.mxu0
      %v942 = vadd.f32 0.0, %v941
      %v943 = vpop.f32.mrf.mxu0
      %v944 = vadd.f32 0.0, %v943
      %945 = vmatmul.bf16.gmra.mxu0 %v907
      %v946 = vpop.f32.mrf.mxu0
      %v947 = vadd.f32 0.0, %v946
      %v948 = vpop.f32.mrf.mxu0
      %v949 = vadd.f32 0.0, %v948
      %950 = vmatmul.bf16.gmra.mxu0 %v910
      %v951 = vpop.f32.mrf.mxu0
      %v952 = vadd.f32 0.0, %v951
      %v953 = vpop.f32.mrf.mxu0
      %v954 = vadd.f32 0.0, %v953
      %955 = vmatmul.bf16.gmra.mxu0 %v913
      %v956 = vpop.f32.mrf.mxu0
      %v957 = vadd.f32 0.0, %v956
      %v958 = vpop.f32.mrf.mxu0
      %v959 = vadd.f32 0.0, %v958
      %960 = vmatmul.bf16.gmra.mxu0 %v916
      %v961 = vpop.f32.mrf.mxu0
      %v962 = vadd.f32 0.0, %v961
      %v963 = vpop.f32.mrf.mxu0
      %v964 = vadd.f32 0.0, %v963
      %965 = vmatmul.bf16.gmra.mxu0 %v919
      %v966 = vpop.f32.mrf.mxu0
      %v967 = vadd.f32 0.0, %v966
      %v968 = vpop.f32.mrf.mxu0
      %v969 = vadd.f32 0.0, %v968
      %970 = vmatmul.bf16.gmra.mxu0 %v922
      %v971 = vpop.f32.mrf.mxu0
      %v972 = vadd.f32 0.0, %v971
      %v973 = vpop.f32.mrf.mxu0
      %v974 = vadd.f32 0.0, %v973
      %975 = vdwg.mxu0
      %vm976 = vcmask 130048
      %v977 = vsel %vm976, %v937, -inf
      %978 = vmax.xlane.f32.xlu0 %v977
      %v979 = vpop.xlane.xlu0 %978
      %v980 = vsel %vm976, %v939, -inf
      %981 = vmax.xlane.f32.xlu0 %v980
      %v982 = vpop.xlane.xlu0 %981
      %v983 = vsel %vm976, %v942, -inf
      %984 = vmax.xlane.f32.xlu0 %v983
      %v985 = vpop.xlane.xlu0 %984
      %v986 = vsel %vm976, %v944, -inf
      %987 = vmax.xlane.f32.xlu0 %v986
      %v988 = vpop.xlane.xlu0 %987
      %v989 = vsel %vm976, %v947, -inf
      %990 = vmax.xlane.f32.xlu0 %v989
      %v991 = vpop.xlane.xlu0 %990
      %v992 = vsel %vm976, %v949, -inf
      %993 = vmax.xlane.f32.xlu0 %v992
      %v994 = vpop.xlane.xlu0 %993
      %v995 = vsel %vm976, %v952, -inf
      %996 = vmax.xlane.f32.xlu0 %v995
      %v997 = vpop.xlane.xlu0 %996
      %v998 = vsel %vm976, %v954, -inf
      %999 = vmax.xlane.f32.xlu0 %v998
      %v1000 = vpop.xlane.xlu0 %999
      %v1001 = vsel %vm976, %v957, -inf
      %1002 = vmax.xlane.f32.xlu0 %v1001
      %v1003 = vpop.xlane.xlu0 %1002
      %v1004 = vsel %vm976, %v959, -inf
      %1005 = vmax.xlane.f32.xlu0 %v1004
      %v1006 = vpop.xlane.xlu0 %1005
      %v1007 = vsel %vm976, %v962, -inf
      %1008 = vmax.xlane.f32.xlu0 %v1007
      %v1009 = vpop.xlane.xlu0 %1008
      %v1010 = vsel %vm976, %v964, -inf
      %1011 = vmax.xlane.f32.xlu0 %v1010
      %v1012 = vpop.xlane.xlu0 %1011
      %v1013 = vsel %vm976, %v967, -inf
      %1014 = vmax.xlane.f32.xlu0 %v1013
      %v1015 = vpop.xlane.xlu0 %1014
      %v1016 = vsel %vm976, %v969, -inf
      %1017 = vmax.xlane.f32.xlu0 %v1016
      %v1018 = vpop.xlane.xlu0 %1017
      %v1019 = vsel %vm976, %v972, -inf
      %1020 = vmax.xlane.f32.xlu0 %v1019
      %v1021 = vpop.xlane.xlu0 %1020
      %v1022 = vsel %vm976, %v974, -inf
      %1023 = vmax.xlane.f32.xlu0 %v1022
      %v1024 = vpop.xlane.xlu0 %1023
      %v1025 = vsub.f32 %v937, %v979
      %v1026 = vsub.f32 %v939, %v982
      %v1027 = vsub.f32 %v942, %v985
      %v1028 = vsub.f32 %v944, %v988
      %v1029 = vsub.f32 %v947, %v991
      %v1030 = vsub.f32 %v949, %v994
      %v1031 = vsub.f32 %v952, %v997
      %v1032 = vsub.f32 %v954, %v1000
      %v1033 = vsub.f32 %v957, %v1003
      %v1034 = vsub.f32 %v959, %v1006
      %v1035 = vsub.f32 %v962, %v1009
      %v1036 = vsub.f32 %v964, %v1012
      %v1037 = vsub.f32 %v967, %v1015
      %v1038 = vsub.f32 %v969, %v1018
      %v1039 = vsub.f32 %v972, %v1021
      %v1040 = vsub.f32 %v974, %v1024
      %v1041 = vmul.f32 %v1025, 1.442695
      %v1042 = vpow.pop %v1041
      %v1043 = vmul.f32 %v1026, 1.442695
      %v1044 = vpow.pop %v1043
      %v1045 = vmul.f32 %v1027, 1.442695
      %v1046 = vpow.pop %v1045
      %v1047 = vmul.f32 %v1028, 1.442695
      %v1048 = vpow.pop %v1047
      %v1049 = vmul.f32 %v1029, 1.442695
      %v1050 = vpow.pop %v1049
      %v1051 = vmul.f32 %v1030, 1.442695
      %v1052 = vpow.pop %v1051
      %v1053 = vmul.f32 %v1031, 1.442695
      %v1054 = vpow.pop %v1053
      %v1055 = vmul.f32 %v1032, 1.442695
      %v1056 = vpow.pop %v1055
      %v1057 = vmul.f32 %v1033, 1.442695
      %v1058 = vpow.pop %v1057
      %v1059 = vmul.f32 %v1034, 1.442695
      %v1060 = vpow.pop %v1059
      %v1061 = vmul.f32 %v1035, 1.442695
      %v1062 = vpow.pop %v1061
      %v1063 = vmul.f32 %v1036, 1.442695
      %v1064 = vpow.pop %v1063
      %v1065 = vmul.f32 %v1037, 1.442695
      %v1066 = vpow.pop %v1065
      %v1067 = vmul.f32 %v1038, 1.442695
      %v1068 = vpow.pop %v1067
      %v1069 = vmul.f32 %v1039, 1.442695
      %v1070 = vpow.pop %v1069
      %v1071 = vmul.f32 %v1040, 1.442695
      %v1072 = vpow.pop %v1071
      %v1073 = vsel %vm976, %v1042, 0.0
      %1074 = vadd.xlane.f32.xlu0 %v1073
      %v1075 = vpop.xlane.xlu0 %1074
      %v1076 = vsel %vm976, %v1044, 0.0
      %1077 = vadd.xlane.f32.xlu0 %v1076
      %v1078 = vpop.xlane.xlu0 %1077
      %v1079 = vsel %vm976, %v1046, 0.0
      %1080 = vadd.xlane.f32.xlu0 %v1079
      %v1081 = vpop.xlane.xlu0 %1080
      %v1082 = vsel %vm976, %v1048, 0.0
      %1083 = vadd.xlane.f32.xlu0 %v1082
      %v1084 = vpop.xlane.xlu0 %1083
      %v1085 = vsel %vm976, %v1050, 0.0
      %1086 = vadd.xlane.f32.xlu0 %v1085
      %v1087 = vpop.xlane.xlu0 %1086
      %v1088 = vsel %vm976, %v1052, 0.0
      %1089 = vadd.xlane.f32.xlu0 %v1088
      %v1090 = vpop.xlane.xlu0 %1089
      %v1091 = vsel %vm976, %v1054, 0.0
      %1092 = vadd.xlane.f32.xlu0 %v1091
      %v1093 = vpop.xlane.xlu0 %1092
      %v1094 = vsel %vm976, %v1056, 0.0
      %1095 = vadd.xlane.f32.xlu0 %v1094
      %v1096 = vpop.xlane.xlu0 %1095
      %v1097 = vsel %vm976, %v1058, 0.0
      %1098 = vadd.xlane.f32.xlu0 %v1097
      %v1099 = vpop.xlane.xlu0 %1098
      %v1100 = vsel %vm976, %v1060, 0.0
      %1101 = vadd.xlane.f32.xlu0 %v1100
      %v1102 = vpop.xlane.xlu0 %1101
      %v1103 = vsel %vm976, %v1062, 0.0
      %1104 = vadd.xlane.f32.xlu0 %v1103
      %v1105 = vpop.xlane.xlu0 %1104
      %v1106 = vsel %vm976, %v1064, 0.0
      %1107 = vadd.xlane.f32.xlu0 %v1106
      %v1108 = vpop.xlane.xlu0 %1107
      %v1109 = vsel %vm976, %v1066, 0.0
      %1110 = vadd.xlane.f32.xlu0 %v1109
      %v1111 = vpop.xlane.xlu0 %1110
      %v1112 = vsel %vm976, %v1068, 0.0
      %1113 = vadd.xlane.f32.xlu0 %v1112
      %v1114 = vpop.xlane.xlu0 %1113
      %v1115 = vsel %vm976, %v1070, 0.0
      %1116 = vadd.xlane.f32.xlu0 %v1115
      %v1117 = vpop.xlane.xlu0 %1116
      %v1118 = vsel %vm976, %v1072, 0.0
      %1119 = vadd.xlane.f32.xlu0 %v1118
      %v1120 = vpop.xlane.xlu0 %1119
      %v1121 = vrcp.pop %v1075
      %v1122 = vrcp.pop %v1078
      %v1123 = vrcp.pop %v1081
      %v1124 = vrcp.pop %v1084
      %v1125 = vrcp.pop %v1087
      %v1126 = vrcp.pop %v1090
      %v1127 = vrcp.pop %v1093
      %v1128 = vrcp.pop %v1096
      %v1129 = vrcp.pop %v1099
      %v1130 = vrcp.pop %v1102
      %v1131 = vrcp.pop %v1105
      %v1132 = vrcp.pop %v1108
      %v1133 = vrcp.pop %v1111
      %v1134 = vrcp.pop %v1114
      %v1135 = vrcp.pop %v1117
      %v1136 = vrcp.pop %v1120
      %v1137 = vmul.f32 %v1042, %v1121
      %v1138 = vmul.f32 %v1044, %v1122
      %v1139 = vmul.f32 %v1046, %v1123
      %v1140 = vmul.f32 %v1048, %v1124
      %v1141 = vmul.f32 %v1050, %v1125
      %v1142 = vmul.f32 %v1052, %v1126
      %v1143 = vmul.f32 %v1054, %v1127
      %v1144 = vmul.f32 %v1056, %v1128
      %v1145 = vmul.f32 %v1058, %v1129
      %v1146 = vmul.f32 %v1060, %v1130
      %v1147 = vmul.f32 %v1062, %v1131
      %v1148 = vmul.f32 %v1064, %v1132
      %v1149 = vmul.f32 %v1066, %v1133
      %v1150 = vmul.f32 %v1068, %v1134
      %v1151 = vmul.f32 %v1070, %v1135
      %v1152 = vmul.f32 %v1072, %v1136
      %v1153 = vpack.c.bf16 %v1138, %v1137
      %v1154 = vpack.c.bf16 %v1140, %v1139
      %v1155 = vpack.c.bf16 %v1142, %v1141
      %v1156 = vpack.c.bf16 %v1144, %v1143
      %v1157 = vpack.c.bf16 %v1146, %v1145
      %v1158 = vpack.c.bf16 %v1148, %v1147
      %v1159 = vpack.c.bf16 %v1150, %v1149
      %v1160 = vpack.c.bf16 %v1152, %v1151
      %v1161 = vpack.c.bf16 %v754, %v753
      %v1162 = vpack.c.bf16 %v760, %v759
      %v1163 = vpack.c.bf16 %v766, %v765
      %v1164 = vpack.c.bf16 %v772, %v771
      %v1166 = vsel %vm976, %v1153, 0
      %v1169 = vsel %vm976, %v1154, 0
      %v1172 = vsel %vm976, %v1155, 0
      %v1175 = vsel %vm976, %v1156, 0
      %v1178 = vsel %vm976, %v1157, 0
      %v1181 = vsel %vm976, %v1158, 0
      %v1184 = vsel %vm976, %v1159, 0
      %v1187 = vsel %vm976, %v1160, 0
      %1189 = vmatpush.bf16.msra.mxu0 0
      %1190 = vmatpush.bf16.msra.mxu0 0
      %1191 = vmatpush.bf16.msra.mxu0 0
      %1192 = vmatpush.bf16.msra.mxu0 0
      %1193 = vmatpush.bf16.msra.mxu0 0
      %1194 = vmatpush.bf16.msra.mxu0 0
      %1195 = vmatpush.bf16.msra.mxu0 0
      %1196 = vmatpush.bf16.msra.mxu0 %v1161
      %1197 = vmatmul.bf16.gmra.mxu0 %v1166
      %v1198 = vpop.f32.mrf.mxu0
      %v1199 = vadd.f32 0.0, %v1198
      %v1200 = vpop.f32.mrf.mxu0
      %v1201 = vadd.f32 0.0, %v1200
      %1202 = vmatmul.bf16.gmra.mxu0 %v1169
      %v1203 = vpop.f32.mrf.mxu0
      %v1204 = vadd.f32 0.0, %v1203
      %v1205 = vpop.f32.mrf.mxu0
      %v1206 = vadd.f32 0.0, %v1205
      %1207 = vmatmul.bf16.gmra.mxu0 %v1172
      %v1208 = vpop.f32.mrf.mxu0
      %v1209 = vadd.f32 0.0, %v1208
      %v1210 = vpop.f32.mrf.mxu0
      %v1211 = vadd.f32 0.0, %v1210
      %1212 = vmatmul.bf16.gmra.mxu0 %v1175
      %v1213 = vpop.f32.mrf.mxu0
      %v1214 = vadd.f32 0.0, %v1213
      %v1215 = vpop.f32.mrf.mxu0
      %v1216 = vadd.f32 0.0, %v1215
      %1217 = vmatmul.bf16.gmra.mxu0 %v1178
      %v1218 = vpop.f32.mrf.mxu0
      %v1219 = vadd.f32 0.0, %v1218
      %v1220 = vpop.f32.mrf.mxu0
      %v1221 = vadd.f32 0.0, %v1220
      %1222 = vmatmul.bf16.gmra.mxu0 %v1181
      %v1223 = vpop.f32.mrf.mxu0
      %v1224 = vadd.f32 0.0, %v1223
      %v1225 = vpop.f32.mrf.mxu0
      %v1226 = vadd.f32 0.0, %v1225
      %1227 = vmatmul.bf16.gmra.mxu0 %v1184
      %v1228 = vpop.f32.mrf.mxu0
      %v1229 = vadd.f32 0.0, %v1228
      %v1230 = vpop.f32.mrf.mxu0
      %v1231 = vadd.f32 0.0, %v1230
      %1232 = vmatmul.bf16.gmra.mxu0 %v1187
      %v1233 = vpop.f32.mrf.mxu0
      %v1234 = vadd.f32 0.0, %v1233
      %v1235 = vpop.f32.mrf.mxu0
      %v1236 = vadd.f32 0.0, %v1235
      %1237 = vdwg.mxu0
      %1238 = vmatpush.bf16.msra.mxu0 0
      %1239 = vmatpush.bf16.msra.mxu0 0
      %1240 = vmatpush.bf16.msra.mxu0 0
      %1241 = vmatpush.bf16.msra.mxu0 0
      %1242 = vmatpush.bf16.msra.mxu0 0
      %1243 = vmatpush.bf16.msra.mxu0 0
      %1244 = vmatpush.bf16.msra.mxu0 0
      %1245 = vmatpush.bf16.msra.mxu0 %v1162
      %1246 = vmatmul.bf16.gmra.mxu0 %v1166
      %v1247 = vpop.f32.mrf.mxu0
      %v1248 = vadd.f32 0.0, %v1247
      %v1249 = vpop.f32.mrf.mxu0
      %v1250 = vadd.f32 0.0, %v1249
      %1251 = vmatmul.bf16.gmra.mxu0 %v1169
      %v1252 = vpop.f32.mrf.mxu0
      %v1253 = vadd.f32 0.0, %v1252
      %v1254 = vpop.f32.mrf.mxu0
      %v1255 = vadd.f32 0.0, %v1254
      %1256 = vmatmul.bf16.gmra.mxu0 %v1172
      %v1257 = vpop.f32.mrf.mxu0
      %v1258 = vadd.f32 0.0, %v1257
      %v1259 = vpop.f32.mrf.mxu0
      %v1260 = vadd.f32 0.0, %v1259
      %1261 = vmatmul.bf16.gmra.mxu0 %v1175
      %v1262 = vpop.f32.mrf.mxu0
      %v1263 = vadd.f32 0.0, %v1262
      %v1264 = vpop.f32.mrf.mxu0
      %v1265 = vadd.f32 0.0, %v1264
      %1266 = vmatmul.bf16.gmra.mxu0 %v1178
      %v1267 = vpop.f32.mrf.mxu0
      %v1268 = vadd.f32 0.0, %v1267
      %v1269 = vpop.f32.mrf.mxu0
      %v1270 = vadd.f32 0.0, %v1269
      %1271 = vmatmul.bf16.gmra.mxu0 %v1181
      %v1272 = vpop.f32.mrf.mxu0
      %v1273 = vadd.f32 0.0, %v1272
      %v1274 = vpop.f32.mrf.mxu0
      %v1275 = vadd.f32 0.0, %v1274
      %1276 = vmatmul.bf16.gmra.mxu0 %v1184
      %v1277 = vpop.f32.mrf.mxu0
      %v1278 = vadd.f32 0.0, %v1277
      %v1279 = vpop.f32.mrf.mxu0
      %v1280 = vadd.f32 0.0, %v1279
      %1281 = vmatmul.bf16.gmra.mxu0 %v1187
      %v1282 = vpop.f32.mrf.mxu0
      %v1283 = vadd.f32 0.0, %v1282
      %v1284 = vpop.f32.mrf.mxu0
      %v1285 = vadd.f32 0.0, %v1284
      %1286 = vdwg.mxu0
      %1287 = vmatpush.bf16.msra.mxu0 0
      %1288 = vmatpush.bf16.msra.mxu0 0
      %1289 = vmatpush.bf16.msra.mxu0 0
      %1290 = vmatpush.bf16.msra.mxu0 0
      %1291 = vmatpush.bf16.msra.mxu0 0
      %1292 = vmatpush.bf16.msra.mxu0 0
      %1293 = vmatpush.bf16.msra.mxu0 0
      %1294 = vmatpush.bf16.msra.mxu0 %v1163
      %1295 = vmatmul.bf16.gmra.mxu0 %v1166
      %v1296 = vpop.f32.mrf.mxu0
      %v1297 = vadd.f32 0.0, %v1296
      %v1298 = vpop.f32.mrf.mxu0
      %v1299 = vadd.f32 0.0, %v1298
      %1300 = vmatmul.bf16.gmra.mxu0 %v1169
      %v1301 = vpop.f32.mrf.mxu0
      %v1302 = vadd.f32 0.0, %v1301
      %v1303 = vpop.f32.mrf.mxu0
      %v1304 = vadd.f32 0.0, %v1303
      %1305 = vmatmul.bf16.gmra.mxu0 %v1172
      %v1306 = vpop.f32.mrf.mxu0
      %v1307 = vadd.f32 0.0, %v1306
      %v1308 = vpop.f32.mrf.mxu0
      %v1309 = vadd.f32 0.0, %v1308
      %1310 = vmatmul.bf16.gmra.mxu0 %v1175
      %v1311 = vpop.f32.mrf.mxu0
      %v1312 = vadd.f32 0.0, %v1311
      %v1313 = vpop.f32.mrf.mxu0
      %v1314 = vadd.f32 0.0, %v1313
      %1315 = vmatmul.bf16.gmra.mxu0 %v1178
      %v1316 = vpop.f32.mrf.mxu0
      %v1317 = vadd.f32 0.0, %v1316
      %v1318 = vpop.f32.mrf.mxu0
      %v1319 = vadd.f32 0.0, %v1318
      %1320 = vmatmul.bf16.gmra.mxu0 %v1181
      %v1321 = vpop.f32.mrf.mxu0
      %v1322 = vadd.f32 0.0, %v1321
      %v1323 = vpop.f32.mrf.mxu0
      %v1324 = vadd.f32 0.0, %v1323
      %1325 = vmatmul.bf16.gmra.mxu0 %v1184
      %v1326 = vpop.f32.mrf.mxu0
      %v1327 = vadd.f32 0.0, %v1326
      %v1328 = vpop.f32.mrf.mxu0
      %v1329 = vadd.f32 0.0, %v1328
      %1330 = vmatmul.bf16.gmra.mxu0 %v1187
      %v1331 = vpop.f32.mrf.mxu0
      %v1332 = vadd.f32 0.0, %v1331
      %v1333 = vpop.f32.mrf.mxu0
      %v1334 = vadd.f32 0.0, %v1333
      %1335 = vdwg.mxu0
      %1336 = vmatpush.bf16.msra.mxu0 0
      %1337 = vmatpush.bf16.msra.mxu0 0
      %1338 = vmatpush.bf16.msra.mxu0 0
      %1339 = vmatpush.bf16.msra.mxu0 0
      %1340 = vmatpush.bf16.msra.mxu0 0
      %1341 = vmatpush.bf16.msra.mxu0 0
      %1342 = vmatpush.bf16.msra.mxu0 0
      %1343 = vmatpush.bf16.msra.mxu0 %v1164
      %1344 = vmatmul.bf16.gmra.mxu0 %v1166
      %v1345 = vpop.f32.mrf.mxu0
      %v1346 = vadd.f32 0.0, %v1345
      %v1347 = vpop.f32.mrf.mxu0
      %v1348 = vadd.f32 0.0, %v1347
      %1349 = vmatmul.bf16.gmra.mxu0 %v1169
      %v1350 = vpop.f32.mrf.mxu0
      %v1351 = vadd.f32 0.0, %v1350
      %v1352 = vpop.f32.mrf.mxu0
      %v1353 = vadd.f32 0.0, %v1352
      %1354 = vmatmul.bf16.gmra.mxu0 %v1172
      %v1355 = vpop.f32.mrf.mxu0
      %v1356 = vadd.f32 0.0, %v1355
      %v1357 = vpop.f32.mrf.mxu0
      %v1358 = vadd.f32 0.0, %v1357
      %1359 = vmatmul.bf16.gmra.mxu0 %v1175
      %v1360 = vpop.f32.mrf.mxu0
      %v1361 = vadd.f32 0.0, %v1360
      %v1362 = vpop.f32.mrf.mxu0
      %v1363 = vadd.f32 0.0, %v1362
      %1364 = vmatmul.bf16.gmra.mxu0 %v1178
      %v1365 = vpop.f32.mrf.mxu0
      %v1366 = vadd.f32 0.0, %v1365
      %v1367 = vpop.f32.mrf.mxu0
      %v1368 = vadd.f32 0.0, %v1367
      %1369 = vmatmul.bf16.gmra.mxu0 %v1181
      %v1370 = vpop.f32.mrf.mxu0
      %v1371 = vadd.f32 0.0, %v1370
      %v1372 = vpop.f32.mrf.mxu0
      %v1373 = vadd.f32 0.0, %v1372
      %1374 = vmatmul.bf16.gmra.mxu0 %v1184
      %v1375 = vpop.f32.mrf.mxu0
      %v1376 = vadd.f32 0.0, %v1375
      %v1377 = vpop.f32.mrf.mxu0
      %v1378 = vadd.f32 0.0, %v1377
      %1379 = vmatmul.bf16.gmra.mxu0 %v1187
      %v1380 = vpop.f32.mrf.mxu0
      %v1381 = vadd.f32 0.0, %v1380
      %v1382 = vpop.f32.mrf.mxu0
      %v1383 = vadd.f32 0.0, %v1382
      %1384 = vdwg.mxu0
      %v1385 = vperm.slane %v861, 0
      %v1386 = vperm.slane %v862, 0
      %v1387 = vperm.slane %v863, 0
      %v1388 = vmul.f32 %v1199, %v864
      %v1389 = vmul.f32 %v1248, %v1385
      %v1390 = vmul.f32 %v1297, %v1386
      %v1391 = vmul.f32 %v1346, %v1387
      %v1392 = vmul.f32 %v1201, %v864
      %v1393 = vmul.f32 %v1250, %v1385
      %v1394 = vmul.f32 %v1299, %v1386
      %v1395 = vmul.f32 %v1348, %v1387
      %v1396 = vperm.slane %v861, 1
      %v1397 = vperm.slane %v862, 1
      %v1398 = vperm.slane %v863, 1
      %v1399 = vmul.f32 %v1204, %v867
      %v1400 = vmul.f32 %v1253, %v1396
      %v1401 = vmul.f32 %v1302, %v1397
      %v1402 = vmul.f32 %v1351, %v1398
      %v1403 = vmul.f32 %v1206, %v867
      %v1404 = vmul.f32 %v1255, %v1396
      %v1405 = vmul.f32 %v1304, %v1397
      %v1406 = vmul.f32 %v1353, %v1398
      %v1407 = vadd.f32 %v1388, %v1399
      %v1408 = vadd.f32 %v1389, %v1400
      %v1409 = vadd.f32 %v1390, %v1401
      %v1410 = vadd.f32 %v1391, %v1402
      %v1411 = vadd.f32 %v1392, %v1403
      %v1412 = vadd.f32 %v1393, %v1404
      %v1413 = vadd.f32 %v1394, %v1405
      %v1414 = vadd.f32 %v1395, %v1406
      %v1415 = vperm.slane %v861, 2
      %v1416 = vperm.slane %v862, 2
      %v1417 = vperm.slane %v863, 2
      %v1418 = vmul.f32 %v1209, %v870
      %v1419 = vmul.f32 %v1258, %v1415
      %v1420 = vmul.f32 %v1307, %v1416
      %v1421 = vmul.f32 %v1356, %v1417
      %v1422 = vmul.f32 %v1211, %v870
      %v1423 = vmul.f32 %v1260, %v1415
      %v1424 = vmul.f32 %v1309, %v1416
      %v1425 = vmul.f32 %v1358, %v1417
      %v1426 = vadd.f32 %v1407, %v1418
      %v1427 = vadd.f32 %v1408, %v1419
      %v1428 = vadd.f32 %v1409, %v1420
      %v1429 = vadd.f32 %v1410, %v1421
      %v1430 = vadd.f32 %v1411, %v1422
      %v1431 = vadd.f32 %v1412, %v1423
      %v1432 = vadd.f32 %v1413, %v1424
      %v1433 = vadd.f32 %v1414, %v1425
      %v1434 = vperm.slane %v861, 3
      %v1435 = vperm.slane %v862, 3
      %v1436 = vperm.slane %v863, 3
      %v1437 = vmul.f32 %v1214, %v873
      %v1438 = vmul.f32 %v1263, %v1434
      %v1439 = vmul.f32 %v1312, %v1435
      %v1440 = vmul.f32 %v1361, %v1436
      %v1441 = vmul.f32 %v1216, %v873
      %v1442 = vmul.f32 %v1265, %v1434
      %v1443 = vmul.f32 %v1314, %v1435
      %v1444 = vmul.f32 %v1363, %v1436
      %v1445 = vadd.f32 %v1426, %v1437
      %v1446 = vadd.f32 %v1427, %v1438
      %v1447 = vadd.f32 %v1428, %v1439
      %v1448 = vadd.f32 %v1429, %v1440
      %v1449 = vadd.f32 %v1430, %v1441
      %v1450 = vadd.f32 %v1431, %v1442
      %v1451 = vadd.f32 %v1432, %v1443
      %v1452 = vadd.f32 %v1433, %v1444
      %v1453 = vperm.slane %v861, 4
      %v1454 = vperm.slane %v862, 4
      %v1455 = vperm.slane %v863, 4
      %v1456 = vmul.f32 %v1219, %v876
      %v1457 = vmul.f32 %v1268, %v1453
      %v1458 = vmul.f32 %v1317, %v1454
      %v1459 = vmul.f32 %v1366, %v1455
      %v1460 = vmul.f32 %v1221, %v876
      %v1461 = vmul.f32 %v1270, %v1453
      %v1462 = vmul.f32 %v1319, %v1454
      %v1463 = vmul.f32 %v1368, %v1455
      %v1464 = vadd.f32 %v1445, %v1456
      %v1465 = vadd.f32 %v1446, %v1457
      %v1466 = vadd.f32 %v1447, %v1458
      %v1467 = vadd.f32 %v1448, %v1459
      %v1468 = vadd.f32 %v1449, %v1460
      %v1469 = vadd.f32 %v1450, %v1461
      %v1470 = vadd.f32 %v1451, %v1462
      %v1471 = vadd.f32 %v1452, %v1463
      %v1472 = vperm.slane %v861, 5
      %v1473 = vperm.slane %v862, 5
      %v1474 = vperm.slane %v863, 5
      %v1475 = vmul.f32 %v1224, %v879
      %v1476 = vmul.f32 %v1273, %v1472
      %v1477 = vmul.f32 %v1322, %v1473
      %v1478 = vmul.f32 %v1371, %v1474
      %v1479 = vmul.f32 %v1226, %v879
      %v1480 = vmul.f32 %v1275, %v1472
      %v1481 = vmul.f32 %v1324, %v1473
      %v1482 = vmul.f32 %v1373, %v1474
      %v1483 = vadd.f32 %v1464, %v1475
      %v1484 = vadd.f32 %v1465, %v1476
      %v1485 = vadd.f32 %v1466, %v1477
      %v1486 = vadd.f32 %v1467, %v1478
      %v1487 = vadd.f32 %v1468, %v1479
      %v1488 = vadd.f32 %v1469, %v1480
      %v1489 = vadd.f32 %v1470, %v1481
      %v1490 = vadd.f32 %v1471, %v1482
      %v1491 = vperm.slane %v861, 6
      %v1492 = vperm.slane %v862, 6
      %v1493 = vperm.slane %v863, 6
      %v1494 = vmul.f32 %v1229, %v882
      %v1495 = vmul.f32 %v1278, %v1491
      %v1496 = vmul.f32 %v1327, %v1492
      %v1497 = vmul.f32 %v1376, %v1493
      %v1498 = vmul.f32 %v1231, %v882
      %v1499 = vmul.f32 %v1280, %v1491
      %v1500 = vmul.f32 %v1329, %v1492
      %v1501 = vmul.f32 %v1378, %v1493
      %v1502 = vadd.f32 %v1483, %v1494
      %v1503 = vadd.f32 %v1484, %v1495
      %v1504 = vadd.f32 %v1485, %v1496
      %v1505 = vadd.f32 %v1486, %v1497
      %v1506 = vadd.f32 %v1487, %v1498
      %v1507 = vadd.f32 %v1488, %v1499
      %v1508 = vadd.f32 %v1489, %v1500
      %v1509 = vadd.f32 %v1490, %v1501
      %v1510 = vperm.slane %v861, 7
      %v1511 = vperm.slane %v862, 7
      %v1512 = vperm.slane %v863, 7
      %v1513 = vmul.f32 %v1234, %v885
      %v1514 = vmul.f32 %v1283, %v1510
      %v1515 = vmul.f32 %v1332, %v1511
      %v1516 = vmul.f32 %v1381, %v1512
      %v1517 = vmul.f32 %v1236, %v885
      %v1518 = vmul.f32 %v1285, %v1510
      %v1519 = vmul.f32 %v1334, %v1511
      %v1520 = vmul.f32 %v1383, %v1512
      %v1521 = vadd.f32 %v1502, %v1513
      %v1522 = vadd.f32 %v1503, %v1514
      %v1523 = vadd.f32 %v1504, %v1515
      %v1524 = vadd.f32 %v1505, %v1516
      %v1525 = vadd.f32 %v1506, %v1517
      %v1526 = vadd.f32 %v1507, %v1518
      %v1527 = vadd.f32 %v1508, %v1519
      %v1528 = vadd.f32 %v1509, %v1520
      %1531 = vrot.lane.b32.xlu0 %v1521, 96
      %v1532 = vpop.permute.xlu0 %1531
      %1533 = vrot.lane.b32.xlu0 %v1525, 96
      %v1534 = vpop.permute.xlu0 %1533
      %1537 = vrot.lane.b32.xlu0 %v1521, 64
      %v1538 = vpop.permute.xlu0 %1537
      %1539 = vrot.lane.b32.xlu0 %v1525, 64
      %v1540 = vpop.permute.xlu0 %1539
      %1543 = vrot.lane.b32.xlu0 %v1521, 32
      %v1544 = vpop.permute.xlu0 %1543
      %1545 = vrot.lane.b32.xlu0 %v1525, 32
      %v1546 = vpop.permute.xlu0 %1545
      %1551 = vrot.lane.b32.xlu0 %v1522, 96
      %v1552 = vpop.permute.xlu0 %1551
      %1553 = vrot.lane.b32.xlu0 %v1526, 96
      %v1554 = vpop.permute.xlu0 %1553
      %1557 = vrot.lane.b32.xlu0 %v1522, 64
      %v1558 = vpop.permute.xlu0 %1557
      %1559 = vrot.lane.b32.xlu0 %v1526, 64
      %v1560 = vpop.permute.xlu0 %1559
      %1563 = vrot.lane.b32.xlu0 %v1522, 32
      %v1564 = vpop.permute.xlu0 %1563
      %1565 = vrot.lane.b32.xlu0 %v1526, 32
      %v1566 = vpop.permute.xlu0 %1565
      %1571 = vrot.lane.b32.xlu0 %v1523, 96
      %v1572 = vpop.permute.xlu0 %1571
      %1573 = vrot.lane.b32.xlu0 %v1527, 96
      %v1574 = vpop.permute.xlu0 %1573
      %1577 = vrot.lane.b32.xlu0 %v1523, 64
      %v1578 = vpop.permute.xlu0 %1577
      %1579 = vrot.lane.b32.xlu0 %v1527, 64
      %v1580 = vpop.permute.xlu0 %1579
      %1583 = vrot.lane.b32.xlu0 %v1523, 32
      %v1584 = vpop.permute.xlu0 %1583
      %1585 = vrot.lane.b32.xlu0 %v1527, 32
      %v1586 = vpop.permute.xlu0 %1585
      %1591 = vrot.lane.b32.xlu0 %v1524, 96
      %v1592 = vpop.permute.xlu0 %1591
      %1593 = vrot.lane.b32.xlu0 %v1528, 96
      %v1594 = vpop.permute.xlu0 %1593
      %1597 = vrot.lane.b32.xlu0 %v1524, 64
      %v1598 = vpop.permute.xlu0 %1597
      %1599 = vrot.lane.b32.xlu0 %v1528, 64
      %v1600 = vpop.permute.xlu0 %1599
      %1603 = vrot.lane.b32.xlu0 %v1524, 32
      %v1604 = vpop.permute.xlu0 %1603
      %1605 = vrot.lane.b32.xlu0 %v1528, 32
      %v1606 = vpop.permute.xlu0 %1605
      %v1609 = vpack.c.bf16 %v1525, %v1521
      %v1610 = vpack.c.bf16 %v1534, %v1532
      %v1611 = vpack.c.bf16 %v1540, %v1538
      %v1612 = vpack.c.bf16 %v1546, %v1544
      %v1613 = vpack.c.bf16 %v1526, %v1522
      %v1614 = vpack.c.bf16 %v1554, %v1552
      %v1615 = vpack.c.bf16 %v1560, %v1558
      %v1616 = vpack.c.bf16 %v1566, %v1564
      %v1617 = vpack.c.bf16 %v1527, %v1523
      %v1618 = vpack.c.bf16 %v1574, %v1572
      %v1619 = vpack.c.bf16 %v1580, %v1578
      %v1620 = vpack.c.bf16 %v1586, %v1584
      %v1621 = vpack.c.bf16 %v1528, %v1524
      %v1622 = vpack.c.bf16 %v1594, %v1592
      %v1623 = vpack.c.bf16 %v1600, %v1598
      %v1624 = vpack.c.bf16 %v1606, %v1604
      %v1625 = vld [vmem:[%s7] sm:$0xf]
      %v1626 = vld [vmem:[%s7 + $0x4] sm:$0xf]
      %v1627 = vld [vmem:[%s7 + $0x8] sm:$0xf]
      %v1628 = vld [vmem:[%s7 + $0xc] sm:$0xf]
      %v1629 = vld [vmem:[%s8] sm:$0x1]
      %v1631 = vperm.slane %v1629, 0
      %v1637 = vunpack.c.l.b16 %v1625
      %v1638 = vunpack.c.l.b16 %v1626
      %v1639 = vunpack.c.l.b16 %v1627
      %v1640 = vunpack.c.l.b16 %v1628
      %v1641 = vpack.c.b16 %v1638, %v1637
      %v1642 = vpack.c.b16 %v1640, %v1639
      %v1646 = vsel %vm513, %v1609, 0
      %v1649 = vsel %vm513, %v1610, 0
      %v1652 = vsel %vm513, %v1611, 0
      %v1655 = vsel %vm513, %v1612, 0
      %v1658 = vsel %vm513, %v1613, 0
      %v1661 = vsel %vm513, %v1614, 0
      %v1664 = vsel %vm513, %v1615, 0
      %v1667 = vsel %vm513, %v1616, 0
      %v1670 = vsel %vm513, %v1617, 0
      %v1673 = vsel %vm513, %v1618, 0
      %v1676 = vsel %vm513, %v1619, 0
      %v1679 = vsel %vm513, %v1620, 0
      %v1682 = vsel %vm513, %v1621, 0
      %v1685 = vsel %vm513, %v1622, 0
      %v1688 = vsel %vm513, %v1623, 0
      %v1691 = vsel %vm513, %v1624, 0
      %1693 = vmatpush.bf16.msra.mxu0 0
      %1694 = vmatpush.bf16.msra.mxu0 0
      %1695 = vmatpush.bf16.msra.mxu0 0
      %1696 = vmatpush.bf16.msra.mxu0 0
      %1697 = vmatpush.bf16.msra.mxu0 0
      %1698 = vmatpush.bf16.msra.mxu0 0
      %1699 = vmatpush.bf16.msra.mxu0 %v1642
      %1700 = vmatpush.bf16.msra.mxu0 %v1641
      %1701 = vmatmul.bf16.gmra.mxu0 %v1646
      %v1702 = vpop.f32.mrf.mxu0
      %v1703 = vadd.f32 %v1631, %v1702
      %v1704 = vpop.f32.mrf.mxu0
      %v1705 = vadd.f32 %v1631, %v1704
      %1706 = vmatmul.bf16.gmra.mxu0 %v1649
      %v1707 = vpop.f32.mrf.mxu0
      %v1708 = vadd.f32 %v1631, %v1707
      %v1709 = vpop.f32.mrf.mxu0
      %v1710 = vadd.f32 %v1631, %v1709
      %1711 = vmatmul.bf16.gmra.mxu0 %v1652
      %v1712 = vpop.f32.mrf.mxu0
      %v1713 = vadd.f32 %v1631, %v1712
      %v1714 = vpop.f32.mrf.mxu0
      %v1715 = vadd.f32 %v1631, %v1714
      %1716 = vmatmul.bf16.gmra.mxu0 %v1655
      %v1717 = vpop.f32.mrf.mxu0
      %v1718 = vadd.f32 %v1631, %v1717
      %v1719 = vpop.f32.mrf.mxu0
      %v1720 = vadd.f32 %v1631, %v1719
      %1721 = vmatmul.bf16.gmra.mxu0 %v1658
      %v1722 = vpop.f32.mrf.mxu0
      %v1723 = vadd.f32 %v1631, %v1722
      %v1724 = vpop.f32.mrf.mxu0
      %v1725 = vadd.f32 %v1631, %v1724
      %1726 = vmatmul.bf16.gmra.mxu0 %v1661
      %v1727 = vpop.f32.mrf.mxu0
      %v1728 = vadd.f32 %v1631, %v1727
      %v1729 = vpop.f32.mrf.mxu0
      %v1730 = vadd.f32 %v1631, %v1729
      %1731 = vmatmul.bf16.gmra.mxu0 %v1664
      %v1732 = vpop.f32.mrf.mxu0
      %v1733 = vadd.f32 %v1631, %v1732
      %v1734 = vpop.f32.mrf.mxu0
      %v1735 = vadd.f32 %v1631, %v1734
      %1736 = vmatmul.bf16.gmra.mxu0 %v1667
      %v1737 = vpop.f32.mrf.mxu0
      %v1738 = vadd.f32 %v1631, %v1737
      %v1739 = vpop.f32.mrf.mxu0
      %v1740 = vadd.f32 %v1631, %v1739
      %1741 = vmatmul.bf16.gmra.mxu0 %v1670
      %v1742 = vpop.f32.mrf.mxu0
      %v1743 = vadd.f32 %v1631, %v1742
      %v1744 = vpop.f32.mrf.mxu0
      %v1745 = vadd.f32 %v1631, %v1744
      %1746 = vmatmul.bf16.gmra.mxu0 %v1673
      %v1747 = vpop.f32.mrf.mxu0
      %v1748 = vadd.f32 %v1631, %v1747
      %v1749 = vpop.f32.mrf.mxu0
      %v1750 = vadd.f32 %v1631, %v1749
      %1751 = vmatmul.bf16.gmra.mxu0 %v1676
      %v1752 = vpop.f32.mrf.mxu0
      %v1753 = vadd.f32 %v1631, %v1752
      %v1754 = vpop.f32.mrf.mxu0
      %v1755 = vadd.f32 %v1631, %v1754
      %1756 = vmatmul.bf16.gmra.mxu0 %v1679
      %v1757 = vpop.f32.mrf.mxu0
      %v1758 = vadd.f32 %v1631, %v1757
      %v1759 = vpop.f32.mrf.mxu0
      %v1760 = vadd.f32 %v1631, %v1759
      %1761 = vmatmul.bf16.gmra.mxu0 %v1682
      %v1762 = vpop.f32.mrf.mxu0
      %v1763 = vadd.f32 %v1631, %v1762
      %v1764 = vpop.f32.mrf.mxu0
      %v1765 = vadd.f32 %v1631, %v1764
      %1766 = vmatmul.bf16.gmra.mxu0 %v1685
      %v1767 = vpop.f32.mrf.mxu0
      %v1768 = vadd.f32 %v1631, %v1767
      %v1769 = vpop.f32.mrf.mxu0
      %v1770 = vadd.f32 %v1631, %v1769
      %1771 = vmatmul.bf16.gmra.mxu0 %v1688
      %v1772 = vpop.f32.mrf.mxu0
      %v1773 = vadd.f32 %v1631, %v1772
      %v1774 = vpop.f32.mrf.mxu0
      %v1775 = vadd.f32 %v1631, %v1774
      %1776 = vmatmul.bf16.gmra.mxu0 %v1691
      %v1777 = vpop.f32.mrf.mxu0
      %v1778 = vadd.f32 %v1631, %v1777
      %v1779 = vpop.f32.mrf.mxu0
      %v1780 = vadd.f32 %v1631, %v1779
      %1781 = vdwg.mxu0
      %1782 = vst.msk [vmem:[%s379] sm:$0xff] %vm513, %v1703
      %1783 = vst.msk [vmem:[%s379 + $0x8] sm:$0xff] %vm513, %v1705
      %1784 = vst.msk [vmem:[%s379 + $0x10] sm:$0xff] %vm513, %v1708
      %1785 = vst.msk [vmem:[%s379 + $0x18] sm:$0xff] %vm513, %v1710
      %1786 = vst.msk [vmem:[%s379 + $0x20] sm:$0xff] %vm513, %v1713
      %1787 = vst.msk [vmem:[%s379 + $0x28] sm:$0xff] %vm513, %v1715
      %1788 = vst.msk [vmem:[%s379 + $0x30] sm:$0xff] %vm513, %v1718
      %1789 = vst.msk [vmem:[%s379 + $0x38] sm:$0xff] %vm513, %v1720
      %1790 = vst.msk [vmem:[%s379 + $0x40] sm:$0xff] %vm513, %v1723
      %1791 = vst.msk [vmem:[%s379 + $0x48] sm:$0xff] %vm513, %v1725
      %1792 = vst.msk [vmem:[%s379 + $0x50] sm:$0xff] %vm513, %v1728
      %1793 = vst.msk [vmem:[%s379 + $0x58] sm:$0xff] %vm513, %v1730
      %1794 = vst.msk [vmem:[%s379 + $0x60] sm:$0xff] %vm513, %v1733
      %1795 = vst.msk [vmem:[%s379 + $0x68] sm:$0xff] %vm513, %v1735
      %1796 = vst.msk [vmem:[%s379 + $0x70] sm:$0xff] %vm513, %v1738
      %1797 = vst.msk [vmem:[%s379 + $0x78] sm:$0xff] %vm513, %v1740
      %1798 = vst.msk [vmem:[%s379 + $0x80] sm:$0xff] %vm513, %v1743
      %1799 = vst.msk [vmem:[%s379 + $0x88] sm:$0xff] %vm513, %v1745
      %1800 = vst.msk [vmem:[%s379 + $0x90] sm:$0xff] %vm513, %v1748
      %1801 = vst.msk [vmem:[%s379 + $0x98] sm:$0xff] %vm513, %v1750
      %1802 = vst.msk [vmem:[%s379 + $0xa0] sm:$0xff] %vm513, %v1753
      %1803 = vst.msk [vmem:[%s379 + $0xa8] sm:$0xff] %vm513, %v1755
      %1804 = vst.msk [vmem:[%s379 + $0xb0] sm:$0xff] %vm513, %v1758
      %1805 = vst.msk [vmem:[%s379 + $0xb8] sm:$0xff] %vm513, %v1760
      %1806 = vst.msk [vmem:[%s379 + $0xc0] sm:$0xff] %vm513, %v1763
      %1807 = vst.msk [vmem:[%s379 + $0xc8] sm:$0xff] %vm513, %v1765
      %1808 = vst.msk [vmem:[%s379 + $0xd0] sm:$0xff] %vm513, %v1768
      %1809 = vst.msk [vmem:[%s379 + $0xd8] sm:$0xff] %vm513, %v1770
      %1810 = vst.msk [vmem:[%s379 + $0xe0] sm:$0xff] %vm513, %v1773
      %1811 = vst.msk [vmem:[%s379 + $0xe8] sm:$0xff] %vm513, %v1775
      %1812 = vst.msk [vmem:[%s379 + $0xf0] sm:$0xff] %vm513, %v1778
      %1813 = vst.msk [vmem:[%s379 + $0xf8] sm:$0xff] %vm513, %v1780
      %p1814 = scmp.lt.s32.totalorder %s21, 1
      %s1815 = scalar_select %p1814, %s21, 1
      %s1816 = smul.addr %s1815, 32
      %s1817 = smul.addr %s1816, 8
      %s1818 = scalar_lea.vmem %s10, %s1817
      // Predicated region
      $region61: #{tpu_custom_call.1} parent=59 // pred_check
        %p1819 = pneg %p259
      $region62: #{tpu_custom_call.1} parent=59 // pred_check_branch
        %1821 = sbr.rel (%p1819) target = $region64
      $region63: #{tpu_custom_call.1} parent=59 // pred_region
        _
      $region64: #{tpu_custom_call.1} parent=59 // pred_fallthru
        _
    $region60: #{tpu_custom_call.1} parent=5 // pred_fallthru
      _
    %p1822 = scmp.le.s32.totalorder 2, %s16
    // Predicated region
    $region65: #{tpu_custom_call.1} parent=5 // pred_check
      %p1823 = pneg %p1822
    $region66: #{tpu_custom_call.1} parent=5 // pred_check_branch
      %1825 = sbr.rel (%p1823) target = $region68
    $region67: #{tpu_custom_call.1} parent=5 // pred_region
      %s1826 = ssub.s32 %s16, 2
      // Predicated region
      $region69: #{tpu_custom_call.1} parent=67 // pred_check
        %p1827 = pneg %p265
      $region70: #{tpu_custom_call.1} parent=67 // pred_check_branch
        %1829 = sbr.rel (%p1827) target = $region72
      $region71: #{tpu_custom_call.1} parent=67 // pred_region
        %p1830 = scmp.lt.s32.totalorder %s22, 1
        %s1831 = scalar_select %p1830, %s22, 1
        %s1832 = smul.addr %s1831, 32
        %s1833 = smul.addr %s1832, 8
        %s1834 = scalar_lea.vmem %s10, %s1833
      $region72: #{tpu_custom_call.1} parent=67 // pred_fallthru
        _
    $region68: #{tpu_custom_call.1} parent=5 // pred_fallthru
      _
  $region6: #{tpu_custom_call.1} parent=0 // loop_footer
    %s20 = sadd.s32 1, %s16
  $region7: #{tpu_custom_call.1} parent=0 // loop_footer_branch
    %15 = sbr.rel target = $region3
  $region8: #{tpu_custom_call.1} parent=0 // loop_exit
    _

</llo_original>
